<compile_context>
chip_gen: v7x
topology: tpu7x:2x2x1
jax: 0.10.0
libtpu: 0.0.40
codegen_flags: <defaults>
</compile_context>

<pallas_src>
import functools

import numpy as np
import jax
import jax.numpy as jnp
from jax import lax
from jax.experimental import pallas as pl
from jax.experimental.pallas import tpu as pltpu


# ----------------------------------------------------------------------------
# In-kernel helpers (all operate on channels-first (C, H*W) tiles).
# ----------------------------------------------------------------------------
def _pointwise(t, w_ref, b_ref):
    """1x1 conv: out[(Co,HW)] = W[(Co,Ci)] @ t[(Ci,HW)] + b, via Ci lane-dense
    broadcast-FMAs on the VPU (BN scale already folded into W)."""
    w = w_ref[...]                       # (Co, Ci)
    b = b_ref[...]                       # (Co, 1)
    co, ci = w.shape
    hw = t.shape[1]
    acc = jnp.zeros((co, hw), jnp.float32)
    for c in range(ci):
        acc = acc + w[:, c:c + 1] * t[c:c + 1, :]
    return acc + b


def _depthwise3x3(t, w_ref, b_ref, mask, H, W):
    """Depthwise 3x3, stride 1, pad 1 on a (C, H*W) tile.  Each tap is a
    static lane-rotation of the already-loaded tile (XLU) multiplied by a
    precomputed validity mask (handles both image borders and roll wrap)."""
    w = w_ref[...]                       # (C, 9), BN scale folded in
    b = b_ref[...]                       # (C, 1)
    c_dim, hw = t.shape
    acc = jnp.zeros((c_dim, hw), jnp.float32)
    k = 0
    for dy in (-1, 0, 1):
        for dx in (-1, 0, 1):
            s = dy * W + dx              # flat source offset for this tap
            if s == 0:
                tap = t                  # center tap: always valid, no mask
            else:
                # want tap[p] = t[p + s]  ->  roll by (-s) mod hw
                tap = pltpu.roll(t, (-s) % hw, 1)
                tap = tap * mask[k:k + 1, :]
            acc = acc + w[:, k:k + 1] * tap
            k += 1
    return acc + b


def _se_gate(t, w_red_ref, b_red_ref, w_exp_ref, b_exp_ref):
    """Squeeze-and-excite gate, kept in (C, 1) column orientation so no
    transposes / reshapes are needed; tiny matvecs done as unrolled FMAs."""
    se = jnp.mean(t, axis=1, keepdims=True)       # (C, 1)
    wr = w_red_ref[...]                           # (Cr, C)
    we = w_exp_ref[...]                           # (C, Cr)
    cr, c_dim = wr.shape
    r = b_red_ref[...]                            # (Cr, 1)
    for c in range(c_dim):
        r = r + wr[:, c:c + 1] * se[c:c + 1, :]
    r = jnp.maximum(r, 0.0)
    e = b_exp_ref[...]                            # (C, 1)
    for j in range(cr):
        e = e + we[:, j:j + 1] * r[j:j + 1, :]
    return jax.nn.sigmoid(e)                      # (C, 1)


# ----------------------------------------------------------------------------
# Fused kernel: both InvertedResidual blocks for one batch element.
# ----------------------------------------------------------------------------
def _irblock_kernel(x_ref, mask_ref,
                    w1a_ref, b1a_ref, wdwa_ref, b2a_ref, w3a_ref, b3a_ref,
                    w1b_ref, b1b_ref, wdwb_ref, b2b_ref,
                    wred_ref, bred_ref, wexp_ref, bexp_ref,
                    w3b_ref, b3b_ref,
                    out_ref, *, H, W, has_res1):
    x = x_ref[0].astype(jnp.float32)              # (Cin, HW)
    mask = mask_ref[...]                          # (9, HW)

    # ---- InvertedResidual 1 (no SE) ----
    t = jnp.maximum(_pointwise(x, w1a_ref, b1a_ref), 0.0)
    t = jnp.maximum(_depthwise3x3(t, wdwa_ref, b2a_ref, mask, H, W), 0.0)
    y1 = _pointwise(t, w3a_ref, b3a_ref)
    if has_res1:
        y1 = y1 + x

    # ---- InvertedResidual 2 (SE ratio 0.25, residual) ----
    t = jnp.maximum(_pointwise(y1, w1b_ref, b1b_ref), 0.0)
    t = jnp.maximum(_depthwise3x3(t, wdwb_ref, b2b_ref, mask, H, W), 0.0)
    t = t * _se_gate(t, wred_ref, bred_ref, wexp_ref, bexp_ref)
    y2 = _pointwise(t, w3b_ref, b3b_ref) + y1

    out_ref[0] = y2.astype(out_ref.dtype)


# ----------------------------------------------------------------------------
# Host-side helpers.
# ----------------------------------------------------------------------------
def _make_dw_mask(H, W):
    """(9, H*W) f32 mask: tap k valid at flat position p (covers image borders
    and the roll wrap-around positions)."""
    hw = H * W
    row = np.arange(hw) // W
    col = np.arange(hw) % W
    m = np.zeros((9, hw), np.float32)
    k = 0
    for dy in (-1, 0, 1):
        for dx in (-1, 0, 1):
            valid = np.ones(hw, bool)
            if dy == -1:
                valid &= row >= 1
            if dy == 1:
                valid &= row <= H - 2
            if dx == -1:
                valid &= col >= 1
            if dx == 1:
                valid &= col <= W - 2
            m[k] = valid
            k += 1
    return jnp.asarray(m)


def ir_block(x_nchw, p1, p2, in_channels, out_channels):
    """IRBlock forward: ir_block1 (no SE) then ir_block2 (SE 0.25, residual).
    Input / output are NCHW like PyTorch; both blocks run in one pallas_call."""
    N, Cin, H, W = x_nchw.shape
    HW = H * W
    Cout = p2["w3"].shape[0]
    x_flat = x_nchw.reshape(N, Cin, HW)           # contiguous, no transpose
    mask = _make_dw_mask(H, W)

    weights = (mask,
               p1["w1"], p1["b1"], p1["wdw"], p1["b2"], p1["w3"], p1["b3"],
               p2["w1"], p2["b1"], p2["wdw"], p2["b2"],
               p2["w_red"], p2["b_red"], p2["w_exp"], p2["b_exp"],
               p2["w3"], p2["b3"])

    kernel = functools.partial(_irblock_kernel, H=H, W=W,
                               has_res1=(in_channels == out_channels))

    out = pl.pallas_call(
        kernel,
        out_shape=jax.ShapeDtypeStruct((N, Cout, HW), x_nchw.dtype),
        grid_spec=pltpu.PrefetchScalarGridSpec(
            num_scalar_prefetch=0,
            grid=(N,),                                    # parallel batch axis
            in_specs=[pl.BlockSpec((1, Cin, HW), lambda b: (b, 0, 0))]
                    + [pl.BlockSpec(a.shape, lambda b: (0, 0)) for a in weights],
            out_specs=pl.BlockSpec((1, Cout, HW), lambda b: (b, 0, 0)),
        ),
        compiler_params=pltpu.CompilerParams(
            dimension_semantics=("parallel",)),
    )(x_flat, *weights)
    return out.reshape(N, Cout, H, W)


# ----------------------------------------------------------------------------
# Deterministic parameter construction (inference BN folded into weights).
# ----------------------------------------------------------------------------
def make_ir_params(key, in_c, out_c, se_ratio=None, eps=1e-5):
    mid = in_c                                    # exp_ratio = 1.0
    cr = max(1, int(mid * se_ratio)) if se_ratio else 1
    keys = jax.random.split(key, 10)

    def bn(k, c):
        kg, kb, km, kv = jax.random.split(k, 4)
        gamma = 1.0 + 0.1 * jax.random.normal(kg, (c,), jnp.float32)
        beta = 0.1 * jax.random.normal(kb, (c,), jnp.float32)
        mean = 0.1 * jax.random.normal(km, (c,), jnp.float32)
        var = 1.0 + 0.1 * jnp.abs(jax.random.normal(kv, (c,), jnp.float32))
        scale = gamma * lax.rsqrt(var + eps)
        bias = beta - mean * scale
        return scale, bias

    s1, b1 = bn(keys[0], mid)
    s2, b2 = bn(keys[1], mid)
    s3, b3 = bn(keys[2], out_c)

    w_pw = 0.3 * jax.random.normal(keys[3], (mid, in_c), jnp.float32)
    w_dw = 0.3 * jax.random.normal(keys[4], (mid, 3, 3), jnp.float32)
    w_red = 0.3 * jax.random.normal(keys[5], (cr, mid), jnp.float32)
    b_red = 0.1 * jax.random.normal(keys[6], (cr,), jnp.float32)
    w_exp = 0.3 * jax.random.normal(keys[7], (mid, cr), jnp.float32)
    b_exp = 0.1 * jax.random.normal(keys[8], (mid,), jnp.float32)
    w_pwl = 0.3 * jax.random.normal(keys[9], (out_c, mid), jnp.float32)

    # TODO(synk): training-mode BatchNorm (batch-stat updates) has no clean
    # Pallas equivalent here; inference-mode BN is folded into the weights.
    return dict(
        w1=w_pw * s1[:, None], b1=b1[:, None],            # BN1 folded
        wdw=(w_dw * s2[:, None, None]).reshape(mid, 9),   # BN2 folded
        b2=b2[:, None],
        w3=w_pwl * s3[:, None], b3=b3[:, None],           # BN3 folded
        w_red=w_red, b_red=b_red[:, None],
        w_exp=w_exp, b_exp=b_exp[:, None],
    )


# ----------------------------------------------------------------------------
# Pure-JAX reference (NCHW) for correctness checking.
# ----------------------------------------------------------------------------
def ref_inverted_residual(x, p, has_se, has_res):
    t = jnp.einsum('nchw,mc->nmhw', x, p['w1']) + p['b1'].reshape(1, -1, 1, 1)
    t = jnp.maximum(t, 0.0)
    C = t.shape[1]
    wdw = p['wdw'].reshape(C, 1, 3, 3)
    t = lax.conv_general_dilated(
        t, wdw, (1, 1), 'SAME',
        dimension_numbers=('NCHW', 'OIHW', 'NCHW'), feature_group_count=C)
    t = jnp.maximum(t + p['b2'].reshape(1, -1, 1, 1), 0.0)
    if has_se:
        s = jnp.mean(t, axis=(2, 3))                              # (N, C)
        r = jnp.maximum(s @ p['w_red'].T + p['b_red'][:, 0], 0.0)  # (N, Cr)
        e = r @ p['w_exp'].T + p['b_exp'][:, 0]                    # (N, C)
        t = t * jax.nn.sigmoid(e)[:, :, None, None]
    y = jnp.einsum('nchw,oc->nohw', t, p['w3']) + p['b3'].reshape(1, -1, 1, 1)
    if has_res:
        y = y + x
    return y


if __name__ == "__main__":
    N, Cin, Cout, H, W = 2, 4, 8, 16, 16
    key = jax.random.PRNGKey(0)
    kx, kp1, kp2 = jax.random.split(key, 3)

    x_nchw = jax.random.normal(kx, (N, Cin, H, W), jnp.float32)
    params1 = make_ir_params(kp1, Cin, Cout, se_ratio=None)
    params2 = make_ir_params(kp2, Cout, Cout, se_ratio=0.25)

    y = ir_block(x_nchw, params1, params2, Cin, Cout)
    y = jax.block_until_ready(y)

    # Reference check (same folded-BN inference semantics).
    r = ref_inverted_residual(x_nchw, params1, has_se=False,
                              has_res=(Cin == Cout))
    r = ref_inverted_residual(r, params2, has_se=True, has_res=True)

    assert y.shape == (N, Cout, H, W)
    assert bool(jnp.allclose(y, r, rtol=1e-3, atol=1e-3)), "mismatch vs reference"

    print("KERNEL_OK")
</pallas_src>

<mosaic_0001>
module attributes {stable_mosaic.version = 11 : i64} {
  func.func @_irblock_kernel(%arg0: i32, %arg1: memref<1x4x256xf32, #tpu.memory_space<vmem>>, %arg2: memref<9x256xf32, #tpu.memory_space<vmem>>, %arg3: memref<4x4xf32, #tpu.memory_space<vmem>>, %arg4: memref<4x1xf32, #tpu.memory_space<vmem>>, %arg5: memref<4x9xf32, #tpu.memory_space<vmem>>, %arg6: memref<4x1xf32, #tpu.memory_space<vmem>>, %arg7: memref<8x4xf32, #tpu.memory_space<vmem>>, %arg8: memref<8x1xf32, #tpu.memory_space<vmem>>, %arg9: memref<8x8xf32, #tpu.memory_space<vmem>>, %arg10: memref<8x1xf32, #tpu.memory_space<vmem>>, %arg11: memref<8x9xf32, #tpu.memory_space<vmem>>, %arg12: memref<8x1xf32, #tpu.memory_space<vmem>>, %arg13: memref<2x8xf32, #tpu.memory_space<vmem>>, %arg14: memref<2x1xf32, #tpu.memory_space<vmem>>, %arg15: memref<8x2xf32, #tpu.memory_space<vmem>>, %arg16: memref<8x1xf32, #tpu.memory_space<vmem>>, %arg17: memref<8x8xf32, #tpu.memory_space<vmem>>, %arg18: memref<8x1xf32, #tpu.memory_space<vmem>>, %arg19: memref<1x8x256xf32, #tpu.memory_space<vmem>>) attributes {dimension_semantics = [#tpu.dimension_semantics<parallel>], iteration_bounds = array<i64: 2>, scalar_prefetch = 0 : i64, scratch_operands = 0 : i64, tpu.core_type = #tpu.core_type<tc>, window_params = [{transform_indices = @transform_0, window_bounds = array<i64: 1, 4, 256>}, {pipeline_mode = #tpu.pipeline_mode<synchronous>, transform_indices = @transform_1, window_bounds = array<i64: 9, 256>}, {pipeline_mode = #tpu.pipeline_mode<synchronous>, transform_indices = @transform_2, window_bounds = array<i64: 4, 4>}, {pipeline_mode = #tpu.pipeline_mode<synchronous>, transform_indices = @transform_3, window_bounds = array<i64: 4, 1>}, {pipeline_mode = #tpu.pipeline_mode<synchronous>, transform_indices = @transform_4, window_bounds = array<i64: 4, 9>}, {pipeline_mode = #tpu.pipeline_mode<synchronous>, transform_indices = @transform_5, window_bounds = array<i64: 4, 1>}, {pipeline_mode = #tpu.pipeline_mode<synchronous>, transform_indices = @transform_6, window_bounds = array<i64: 8, 4>}, {pipeline_mode = #tpu.pipeline_mode<synchronous>, transform_indices = @transform_7, window_bounds = array<i64: 8, 1>}, {pipeline_mode = #tpu.pipeline_mode<synchronous>, transform_indices = @transform_8, window_bounds = array<i64: 8, 8>}, {pipeline_mode = #tpu.pipeline_mode<synchronous>, transform_indices = @transform_9, window_bounds = array<i64: 8, 1>}, {pipeline_mode = #tpu.pipeline_mode<synchronous>, transform_indices = @transform_10, window_bounds = array<i64: 8, 9>}, {pipeline_mode = #tpu.pipeline_mode<synchronous>, transform_indices = @transform_11, window_bounds = array<i64: 8, 1>}, {pipeline_mode = #tpu.pipeline_mode<synchronous>, transform_indices = @transform_12, window_bounds = array<i64: 2, 8>}, {pipeline_mode = #tpu.pipeline_mode<synchronous>, transform_indices = @transform_13, window_bounds = array<i64: 2, 1>}, {pipeline_mode = #tpu.pipeline_mode<synchronous>, transform_indices = @transform_14, window_bounds = array<i64: 8, 2>}, {pipeline_mode = #tpu.pipeline_mode<synchronous>, transform_indices = @transform_15, window_bounds = array<i64: 8, 1>}, {pipeline_mode = #tpu.pipeline_mode<synchronous>, transform_indices = @transform_16, window_bounds = array<i64: 8, 8>}, {pipeline_mode = #tpu.pipeline_mode<synchronous>, transform_indices = @transform_17, window_bounds = array<i64: 8, 1>}, {transform_indices = @transform_18, window_bounds = array<i64: 1, 8, 256>}]} {
    %c0 = arith.constant 0 : index
    %c0_0 = arith.constant 0 : index
    %c0_1 = arith.constant 0 : index
    %0 = vector.load %arg1[%c0, %c0_0, %c0_1] : memref<1x4x256xf32, #tpu.memory_space<vmem>>, vector<1x4x256xf32>
    %1 = vector.shape_cast %0 : vector<1x4x256xf32> to vector<4x256xf32>
    %c0_2 = arith.constant 0 : index
    %c0_3 = arith.constant 0 : index
    %2 = vector.load %arg2[%c0_2, %c0_3] : memref<9x256xf32, #tpu.memory_space<vmem>>, vector<9x256xf32>
    %c0_4 = arith.constant 0 : index
    %c0_5 = arith.constant 0 : index
    %3 = vector.load %arg3[%c0_4, %c0_5] : memref<4x4xf32, #tpu.memory_space<vmem>>, vector<4x4xf32>
    %c0_6 = arith.constant 0 : index
    %c0_7 = arith.constant 0 : index
    %4 = vector.load %arg4[%c0_6, %c0_7] : memref<4x1xf32, #tpu.memory_space<vmem>>, vector<4x1xf32>
    %cst = arith.constant 0.000000e+00 : f32
    %5 = vector.broadcast %cst : f32 to vector<4x256xf32>
    %6 = vector.extract_strided_slice %3 {offsets = [0, 0], sizes = [4, 1], strides = [1, 1]} : vector<4x4xf32> to vector<4x1xf32>
    %7 = vector.extract_strided_slice %1 {offsets = [0, 0], sizes = [1, 256], strides = [1, 1]} : vector<4x256xf32> to vector<1x256xf32>
    %8 = vector.broadcast %6 : vector<4x1xf32> to vector<4x256xf32>
    %9 = vector.broadcast %7 : vector<1x256xf32> to vector<4x256xf32>
    %10 = arith.mulf %8, %9 : vector<4x256xf32>
    %11 = arith.addf %5, %10 : vector<4x256xf32>
    %12 = vector.extract_strided_slice %3 {offsets = [0, 1], sizes = [4, 1], strides = [1, 1]} : vector<4x4xf32> to vector<4x1xf32>
    %13 = vector.extract_strided_slice %1 {offsets = [1, 0], sizes = [1, 256], strides = [1, 1]} : vector<4x256xf32> to vector<1x256xf32>
    %14 = vector.broadcast %12 : vector<4x1xf32> to vector<4x256xf32>
    %15 = vector.broadcast %13 : vector<1x256xf32> to vector<4x256xf32>
    %16 = arith.mulf %14, %15 : vector<4x256xf32>
    %17 = arith.addf %11, %16 : vector<4x256xf32>
    %18 = vector.extract_strided_slice %3 {offsets = [0, 2], sizes = [4, 1], strides = [1, 1]} : vector<4x4xf32> to vector<4x1xf32>
    %19 = vector.extract_strided_slice %1 {offsets = [2, 0], sizes = [1, 256], strides = [1, 1]} : vector<4x256xf32> to vector<1x256xf32>
    %20 = vector.broadcast %18 : vector<4x1xf32> to vector<4x256xf32>
    %21 = vector.broadcast %19 : vector<1x256xf32> to vector<4x256xf32>
    %22 = arith.mulf %20, %21 : vector<4x256xf32>
    %23 = arith.addf %17, %22 : vector<4x256xf32>
    %24 = vector.extract_strided_slice %3 {offsets = [0, 3], sizes = [4, 1], strides = [1, 1]} : vector<4x4xf32> to vector<4x1xf32>
    %25 = vector.extract_strided_slice %1 {offsets = [3, 0], sizes = [1, 256], strides = [1, 1]} : vector<4x256xf32> to vector<1x256xf32>
    %26 = vector.broadcast %24 : vector<4x1xf32> to vector<4x256xf32>
    %27 = vector.broadcast %25 : vector<1x256xf32> to vector<4x256xf32>
    %28 = arith.mulf %26, %27 : vector<4x256xf32>
    %29 = arith.addf %23, %28 : vector<4x256xf32>
    %30 = vector.broadcast %4 : vector<4x1xf32> to vector<4x256xf32>
    %31 = arith.addf %29, %30 : vector<4x256xf32>
    %cst_8 = arith.constant 0.000000e+00 : f32
    %32 = vector.broadcast %cst_8 : f32 to vector<4x256xf32>
    %33 = arith.maximumf %31, %32 : vector<4x256xf32>
    %c0_9 = arith.constant 0 : index
    %c0_10 = arith.constant 0 : index
    %34 = vector.load %arg5[%c0_9, %c0_10] : memref<4x9xf32, #tpu.memory_space<vmem>>, vector<4x9xf32>
    %c0_11 = arith.constant 0 : index
    %c0_12 = arith.constant 0 : index
    %35 = vector.load %arg6[%c0_11, %c0_12] : memref<4x1xf32, #tpu.memory_space<vmem>>, vector<4x1xf32>
    %cst_13 = arith.constant 0.000000e+00 : f32
    %36 = vector.broadcast %cst_13 : f32 to vector<4x256xf32>
    %c17_i32 = arith.constant 17 : i32
    %37 = tpu.dynamic_rotate %33 by %c17_i32 dim 1 : vector<4x256xf32>, i32 -> vector<4x256xf32>
    %38 = vector.extract_strided_slice %2 {offsets = [0, 0], sizes = [1, 256], strides = [1, 1]} : vector<9x256xf32> to vector<1x256xf32>
    %39 = vector.broadcast %38 : vector<1x256xf32> to vector<4x256xf32>
    %40 = arith.mulf %37, %39 : vector<4x256xf32>
    %41 = vector.extract_strided_slice %34 {offsets = [0, 0], sizes = [4, 1], strides = [1, 1]} : vector<4x9xf32> to vector<4x1xf32>
    %42 = vector.broadcast %41 : vector<4x1xf32> to vector<4x256xf32>
    %43 = arith.mulf %42, %40 : vector<4x256xf32>
    %44 = arith.addf %36, %43 : vector<4x256xf32>
    %c16_i32 = arith.constant 16 : i32
    %45 = tpu.dynamic_rotate %33 by %c16_i32 dim 1 : vector<4x256xf32>, i32 -> vector<4x256xf32>
    %46 = vector.extract_strided_slice %2 {offsets = [1, 0], sizes = [1, 256], strides = [1, 1]} : vector<9x256xf32> to vector<1x256xf32>
    %47 = vector.broadcast %46 : vector<1x256xf32> to vector<4x256xf32>
    %48 = arith.mulf %45, %47 : vector<4x256xf32>
    %49 = vector.extract_strided_slice %34 {offsets = [0, 1], sizes = [4, 1], strides = [1, 1]} : vector<4x9xf32> to vector<4x1xf32>
    %50 = vector.broadcast %49 : vector<4x1xf32> to vector<4x256xf32>
    %51 = arith.mulf %50, %48 : vector<4x256xf32>
    %52 = arith.addf %44, %51 : vector<4x256xf32>
    %c15_i32 = arith.constant 15 : i32
    %53 = tpu.dynamic_rotate %33 by %c15_i32 dim 1 : vector<4x256xf32>, i32 -> vector<4x256xf32>
    %54 = vector.extract_strided_slice %2 {offsets = [2, 0], sizes = [1, 256], strides = [1, 1]} : vector<9x256xf32> to vector<1x256xf32>
    %55 = vector.broadcast %54 : vector<1x256xf32> to vector<4x256xf32>
    %56 = arith.mulf %53, %55 : vector<4x256xf32>
    %57 = vector.extract_strided_slice %34 {offsets = [0, 2], sizes = [4, 1], strides = [1, 1]} : vector<4x9xf32> to vector<4x1xf32>
    %58 = vector.broadcast %57 : vector<4x1xf32> to vector<4x256xf32>
    %59 = arith.mulf %58, %56 : vector<4x256xf32>
    %60 = arith.addf %52, %59 : vector<4x256xf32>
    %c1_i32 = arith.constant 1 : i32
    %61 = tpu.dynamic_rotate %33 by %c1_i32 dim 1 : vector<4x256xf32>, i32 -> vector<4x256xf32>
    %62 = vector.extract_strided_slice %2 {offsets = [3, 0], sizes = [1, 256], strides = [1, 1]} : vector<9x256xf32> to vector<1x256xf32>
    %63 = vector.broadcast %62 : vector<1x256xf32> to vector<4x256xf32>
    %64 = arith.mulf %61, %63 : vector<4x256xf32>
    %65 = vector.extract_strided_slice %34 {offsets = [0, 3], sizes = [4, 1], strides = [1, 1]} : vector<4x9xf32> to vector<4x1xf32>
    %66 = vector.broadcast %65 : vector<4x1xf32> to vector<4x256xf32>
    %67 = arith.mulf %66, %64 : vector<4x256xf32>
    %68 = arith.addf %60, %67 : vector<4x256xf32>
    %69 = vector.extract_strided_slice %34 {offsets = [0, 4], sizes = [4, 1], strides = [1, 1]} : vector<4x9xf32> to vector<4x1xf32>
    %70 = vector.broadcast %69 : vector<4x1xf32> to vector<4x256xf32>
    %71 = arith.mulf %70, %33 : vector<4x256xf32>
    %72 = arith.addf %68, %71 : vector<4x256xf32>
    %c255_i32 = arith.constant 255 : i32
    %73 = tpu.dynamic_rotate %33 by %c255_i32 dim 1 : vector<4x256xf32>, i32 -> vector<4x256xf32>
    %74 = vector.extract_strided_slice %2 {offsets = [5, 0], sizes = [1, 256], strides = [1, 1]} : vector<9x256xf32> to vector<1x256xf32>
    %75 = vector.broadcast %74 : vector<1x256xf32> to vector<4x256xf32>
    %76 = arith.mulf %73, %75 : vector<4x256xf32>
    %77 = vector.extract_strided_slice %34 {offsets = [0, 5], sizes = [4, 1], strides = [1, 1]} : vector<4x9xf32> to vector<4x1xf32>
    %78 = vector.broadcast %77 : vector<4x1xf32> to vector<4x256xf32>
    %79 = arith.mulf %78, %76 : vector<4x256xf32>
    %80 = arith.addf %72, %79 : vector<4x256xf32>
    %c241_i32 = arith.constant 241 : i32
    %81 = tpu.dynamic_rotate %33 by %c241_i32 dim 1 : vector<4x256xf32>, i32 -> vector<4x256xf32>
    %82 = vector.extract_strided_slice %2 {offsets = [6, 0], sizes = [1, 256], strides = [1, 1]} : vector<9x256xf32> to vector<1x256xf32>
    %83 = vector.broadcast %82 : vector<1x256xf32> to vector<4x256xf32>
    %84 = arith.mulf %81, %83 : vector<4x256xf32>
    %85 = vector.extract_strided_slice %34 {offsets = [0, 6], sizes = [4, 1], strides = [1, 1]} : vector<4x9xf32> to vector<4x1xf32>
    %86 = vector.broadcast %85 : vector<4x1xf32> to vector<4x256xf32>
    %87 = arith.mulf %86, %84 : vector<4x256xf32>
    %88 = arith.addf %80, %87 : vector<4x256xf32>
    %c240_i32 = arith.constant 240 : i32
    %89 = tpu.dynamic_rotate %33 by %c240_i32 dim 1 : vector<4x256xf32>, i32 -> vector<4x256xf32>
    %90 = vector.extract_strided_slice %2 {offsets = [7, 0], sizes = [1, 256], strides = [1, 1]} : vector<9x256xf32> to vector<1x256xf32>
    %91 = vector.broadcast %90 : vector<1x256xf32> to vector<4x256xf32>
    %92 = arith.mulf %89, %91 : vector<4x256xf32>
    %93 = vector.extract_strided_slice %34 {offsets = [0, 7], sizes = [4, 1], strides = [1, 1]} : vector<4x9xf32> to vector<4x1xf32>
    %94 = vector.broadcast %93 : vector<4x1xf32> to vector<4x256xf32>
    %95 = arith.mulf %94, %92 : vector<4x256xf32>
    %96 = arith.addf %88, %95 : vector<4x256xf32>
    %c239_i32 = arith.constant 239 : i32
    %97 = tpu.dynamic_rotate %33 by %c239_i32 dim 1 : vector<4x256xf32>, i32 -> vector<4x256xf32>
    %98 = vector.extract_strided_slice %2 {offsets = [8, 0], sizes = [1, 256], strides = [1, 1]} : vector<9x256xf32> to vector<1x256xf32>
    %99 = vector.broadcast %98 : vector<1x256xf32> to vector<4x256xf32>
    %100 = arith.mulf %97, %99 : vector<4x256xf32>
    %101 = vector.extract_strided_slice %34 {offsets = [0, 8], sizes = [4, 1], strides = [1, 1]} : vector<4x9xf32> to vector<4x1xf32>
    %102 = vector.broadcast %101 : vector<4x1xf32> to vector<4x256xf32>
    %103 = arith.mulf %102, %100 : vector<4x256xf32>
    %104 = arith.addf %96, %103 : vector<4x256xf32>
    %105 = vector.broadcast %35 : vector<4x1xf32> to vector<4x256xf32>
    %106 = arith.addf %104, %105 : vector<4x256xf32>
    %cst_14 = arith.constant 0.000000e+00 : f32
    %107 = vector.broadcast %cst_14 : f32 to vector<4x256xf32>
    %108 = arith.maximumf %106, %107 : vector<4x256xf32>
    %c0_15 = arith.constant 0 : index
    %c0_16 = arith.constant 0 : index
    %109 = vector.load %arg7[%c0_15, %c0_16] : memref<8x4xf32, #tpu.memory_space<vmem>>, vector<8x4xf32>
    %c0_17 = arith.constant 0 : index
    %c0_18 = arith.constant 0 : index
    %110 = vector.load %arg8[%c0_17, %c0_18] : memref<8x1xf32, #tpu.memory_space<vmem>>, vector<8x1xf32>
    %cst_19 = arith.constant 0.000000e+00 : f32
    %111 = vector.broadcast %cst_19 : f32 to vector<8x256xf32>
    %112 = vector.extract_strided_slice %109 {offsets = [0, 0], sizes = [8, 1], strides = [1, 1]} : vector<8x4xf32> to vector<8x1xf32>
    %113 = vector.extract_strided_slice %108 {offsets = [0, 0], sizes = [1, 256], strides = [1, 1]} : vector<4x256xf32> to vector<1x256xf32>
    %114 = vector.broadcast %112 : vector<8x1xf32> to vector<8x256xf32>
    %115 = vector.broadcast %113 : vector<1x256xf32> to vector<8x256xf32>
    %116 = arith.mulf %114, %115 : vector<8x256xf32>
    %117 = arith.addf %111, %116 : vector<8x256xf32>
    %118 = vector.extract_strided_slice %109 {offsets = [0, 1], sizes = [8, 1], strides = [1, 1]} : vector<8x4xf32> to vector<8x1xf32>
    %119 = vector.extract_strided_slice %108 {offsets = [1, 0], sizes = [1, 256], strides = [1, 1]} : vector<4x256xf32> to vector<1x256xf32>
    %120 = vector.broadcast %118 : vector<8x1xf32> to vector<8x256xf32>
    %121 = vector.broadcast %119 : vector<1x256xf32> to vector<8x256xf32>
    %122 = arith.mulf %120, %121 : vector<8x256xf32>
    %123 = arith.addf %117, %122 : vector<8x256xf32>
    %124 = vector.extract_strided_slice %109 {offsets = [0, 2], sizes = [8, 1], strides = [1, 1]} : vector<8x4xf32> to vector<8x1xf32>
    %125 = vector.extract_strided_slice %108 {offsets = [2, 0], sizes = [1, 256], strides = [1, 1]} : vector<4x256xf32> to vector<1x256xf32>
    %126 = vector.broadcast %124 : vector<8x1xf32> to vector<8x256xf32>
    %127 = vector.broadcast %125 : vector<1x256xf32> to vector<8x256xf32>
    %128 = arith.mulf %126, %127 : vector<8x256xf32>
    %129 = arith.addf %123, %128 : vector<8x256xf32>
    %130 = vector.extract_strided_slice %109 {offsets = [0, 3], sizes = [8, 1], strides = [1, 1]} : vector<8x4xf32> to vector<8x1xf32>
    %131 = vector.extract_strided_slice %108 {offsets = [3, 0], sizes = [1, 256], strides = [1, 1]} : vector<4x256xf32> to vector<1x256xf32>
    %132 = vector.broadcast %130 : vector<8x1xf32> to vector<8x256xf32>
    %133 = vector.broadcast %131 : vector<1x256xf32> to vector<8x256xf32>
    %134 = arith.mulf %132, %133 : vector<8x256xf32>
    %135 = arith.addf %129, %134 : vector<8x256xf32>
    %136 = vector.broadcast %110 : vector<8x1xf32> to vector<8x256xf32>
    %137 = arith.addf %135, %136 : vector<8x256xf32>
    %c0_20 = arith.constant 0 : index
    %c0_21 = arith.constant 0 : index
    %138 = vector.load %arg9[%c0_20, %c0_21] : memref<8x8xf32, #tpu.memory_space<vmem>>, vector<8x8xf32>
    %c0_22 = arith.constant 0 : index
    %c0_23 = arith.constant 0 : index
    %139 = vector.load %arg10[%c0_22, %c0_23] : memref<8x1xf32, #tpu.memory_space<vmem>>, vector<8x1xf32>
    %cst_24 = arith.constant 0.000000e+00 : f32
    %140 = vector.broadcast %cst_24 : f32 to vector<8x256xf32>
    %141 = vector.extract_strided_slice %138 {offsets = [0, 0], sizes = [8, 1], strides = [1, 1]} : vector<8x8xf32> to vector<8x1xf32>
    %142 = vector.extract_strided_slice %137 {offsets = [0, 0], sizes = [1, 256], strides = [1, 1]} : vector<8x256xf32> to vector<1x256xf32>
    %143 = vector.broadcast %141 : vector<8x1xf32> to vector<8x256xf32>
    %144 = vector.broadcast %142 : vector<1x256xf32> to vector<8x256xf32>
    %145 = arith.mulf %143, %144 : vector<8x256xf32>
    %146 = arith.addf %140, %145 : vector<8x256xf32>
    %147 = vector.extract_strided_slice %138 {offsets = [0, 1], sizes = [8, 1], strides = [1, 1]} : vector<8x8xf32> to vector<8x1xf32>
    %148 = vector.extract_strided_slice %137 {offsets = [1, 0], sizes = [1, 256], strides = [1, 1]} : vector<8x256xf32> to vector<1x256xf32>
    %149 = vector.broadcast %147 : vector<8x1xf32> to vector<8x256xf32>
    %150 = vector.broadcast %148 : vector<1x256xf32> to vector<8x256xf32>
    %151 = arith.mulf %149, %150 : vector<8x256xf32>
    %152 = arith.addf %146, %151 : vector<8x256xf32>
    %153 = vector.extract_strided_slice %138 {offsets = [0, 2], sizes = [8, 1], strides = [1, 1]} : vector<8x8xf32> to vector<8x1xf32>
    %154 = vector.extract_strided_slice %137 {offsets = [2, 0], sizes = [1, 256], strides = [1, 1]} : vector<8x256xf32> to vector<1x256xf32>
    %155 = vector.broadcast %153 : vector<8x1xf32> to vector<8x256xf32>
    %156 = vector.broadcast %154 : vector<1x256xf32> to vector<8x256xf32>
    %157 = arith.mulf %155, %156 : vector<8x256xf32>
    %158 = arith.addf %152, %157 : vector<8x256xf32>
    %159 = vector.extract_strided_slice %138 {offsets = [0, 3], sizes = [8, 1], strides = [1, 1]} : vector<8x8xf32> to vector<8x1xf32>
    %160 = vector.extract_strided_slice %137 {offsets = [3, 0], sizes = [1, 256], strides = [1, 1]} : vector<8x256xf32> to vector<1x256xf32>
    %161 = vector.broadcast %159 : vector<8x1xf32> to vector<8x256xf32>
    %162 = vector.broadcast %160 : vector<1x256xf32> to vector<8x256xf32>
    %163 = arith.mulf %161, %162 : vector<8x256xf32>
    %164 = arith.addf %158, %163 : vector<8x256xf32>
    %165 = vector.extract_strided_slice %138 {offsets = [0, 4], sizes = [8, 1], strides = [1, 1]} : vector<8x8xf32> to vector<8x1xf32>
    %166 = vector.extract_strided_slice %137 {offsets = [4, 0], sizes = [1, 256], strides = [1, 1]} : vector<8x256xf32> to vector<1x256xf32>
    %167 = vector.broadcast %165 : vector<8x1xf32> to vector<8x256xf32>
    %168 = vector.broadcast %166 : vector<1x256xf32> to vector<8x256xf32>
    %169 = arith.mulf %167, %168 : vector<8x256xf32>
    %170 = arith.addf %164, %169 : vector<8x256xf32>
    %171 = vector.extract_strided_slice %138 {offsets = [0, 5], sizes = [8, 1], strides = [1, 1]} : vector<8x8xf32> to vector<8x1xf32>
    %172 = vector.extract_strided_slice %137 {offsets = [5, 0], sizes = [1, 256], strides = [1, 1]} : vector<8x256xf32> to vector<1x256xf32>
    %173 = vector.broadcast %171 : vector<8x1xf32> to vector<8x256xf32>
    %174 = vector.broadcast %172 : vector<1x256xf32> to vector<8x256xf32>
    %175 = arith.mulf %173, %174 : vector<8x256xf32>
    %176 = arith.addf %170, %175 : vector<8x256xf32>
    %177 = vector.extract_strided_slice %138 {offsets = [0, 6], sizes = [8, 1], strides = [1, 1]} : vector<8x8xf32> to vector<8x1xf32>
    %178 = vector.extract_strided_slice %137 {offsets = [6, 0], sizes = [1, 256], strides = [1, 1]} : vector<8x256xf32> to vector<1x256xf32>
    %179 = vector.broadcast %177 : vector<8x1xf32> to vector<8x256xf32>
    %180 = vector.broadcast %178 : vector<1x256xf32> to vector<8x256xf32>
    %181 = arith.mulf %179, %180 : vector<8x256xf32>
    %182 = arith.addf %176, %181 : vector<8x256xf32>
    %183 = vector.extract_strided_slice %138 {offsets = [0, 7], sizes = [8, 1], strides = [1, 1]} : vector<8x8xf32> to vector<8x1xf32>
    %184 = vector.extract_strided_slice %137 {offsets = [7, 0], sizes = [1, 256], strides = [1, 1]} : vector<8x256xf32> to vector<1x256xf32>
    %185 = vector.broadcast %183 : vector<8x1xf32> to vector<8x256xf32>
    %186 = vector.broadcast %184 : vector<1x256xf32> to vector<8x256xf32>
    %187 = arith.mulf %185, %186 : vector<8x256xf32>
    %188 = arith.addf %182, %187 : vector<8x256xf32>
    %189 = vector.broadcast %139 : vector<8x1xf32> to vector<8x256xf32>
    %190 = arith.addf %188, %189 : vector<8x256xf32>
    %cst_25 = arith.constant 0.000000e+00 : f32
    %191 = vector.broadcast %cst_25 : f32 to vector<8x256xf32>
    %192 = arith.maximumf %190, %191 : vector<8x256xf32>
    %c0_26 = arith.constant 0 : index
    %c0_27 = arith.constant 0 : index
    %193 = vector.load %arg11[%c0_26, %c0_27] : memref<8x9xf32, #tpu.memory_space<vmem>>, vector<8x9xf32>
    %c0_28 = arith.constant 0 : index
    %c0_29 = arith.constant 0 : index
    %194 = vector.load %arg12[%c0_28, %c0_29] : memref<8x1xf32, #tpu.memory_space<vmem>>, vector<8x1xf32>
    %cst_30 = arith.constant 0.000000e+00 : f32
    %195 = vector.broadcast %cst_30 : f32 to vector<8x256xf32>
    %c17_i32_31 = arith.constant 17 : i32
    %196 = tpu.dynamic_rotate %192 by %c17_i32_31 dim 1 : vector<8x256xf32>, i32 -> vector<8x256xf32>
    %197 = vector.extract_strided_slice %2 {offsets = [0, 0], sizes = [1, 256], strides = [1, 1]} : vector<9x256xf32> to vector<1x256xf32>
    %198 = vector.broadcast %197 : vector<1x256xf32> to vector<8x256xf32>
    %199 = arith.mulf %196, %198 : vector<8x256xf32>
    %200 = vector.extract_strided_slice %193 {offsets = [0, 0], sizes = [8, 1], strides = [1, 1]} : vector<8x9xf32> to vector<8x1xf32>
    %201 = vector.broadcast %200 : vector<8x1xf32> to vector<8x256xf32>
    %202 = arith.mulf %201, %199 : vector<8x256xf32>
    %203 = arith.addf %195, %202 : vector<8x256xf32>
    %c16_i32_32 = arith.constant 16 : i32
    %204 = tpu.dynamic_rotate %192 by %c16_i32_32 dim 1 : vector<8x256xf32>, i32 -> vector<8x256xf32>
    %205 = vector.extract_strided_slice %2 {offsets = [1, 0], sizes = [1, 256], strides = [1, 1]} : vector<9x256xf32> to vector<1x256xf32>
    %206 = vector.broadcast %205 : vector<1x256xf32> to vector<8x256xf32>
    %207 = arith.mulf %204, %206 : vector<8x256xf32>
    %208 = vector.extract_strided_slice %193 {offsets = [0, 1], sizes = [8, 1], strides = [1, 1]} : vector<8x9xf32> to vector<8x1xf32>
    %209 = vector.broadcast %208 : vector<8x1xf32> to vector<8x256xf32>
    %210 = arith.mulf %209, %207 : vector<8x256xf32>
    %211 = arith.addf %203, %210 : vector<8x256xf32>
    %c15_i32_33 = arith.constant 15 : i32
    %212 = tpu.dynamic_rotate %192 by %c15_i32_33 dim 1 : vector<8x256xf32>, i32 -> vector<8x256xf32>
    %213 = vector.extract_strided_slice %2 {offsets = [2, 0], sizes = [1, 256], strides = [1, 1]} : vector<9x256xf32> to vector<1x256xf32>
    %214 = vector.broadcast %213 : vector<1x256xf32> to vector<8x256xf32>
    %215 = arith.mulf %212, %214 : vector<8x256xf32>
    %216 = vector.extract_strided_slice %193 {offsets = [0, 2], sizes = [8, 1], strides = [1, 1]} : vector<8x9xf32> to vector<8x1xf32>
    %217 = vector.broadcast %216 : vector<8x1xf32> to vector<8x256xf32>
    %218 = arith.mulf %217, %215 : vector<8x256xf32>
    %219 = arith.addf %211, %218 : vector<8x256xf32>
    %c1_i32_34 = arith.constant 1 : i32
    %220 = tpu.dynamic_rotate %192 by %c1_i32_34 dim 1 : vector<8x256xf32>, i32 -> vector<8x256xf32>
    %221 = vector.extract_strided_slice %2 {offsets = [3, 0], sizes = [1, 256], strides = [1, 1]} : vector<9x256xf32> to vector<1x256xf32>
    %222 = vector.broadcast %221 : vector<1x256xf32> to vector<8x256xf32>
    %223 = arith.mulf %220, %222 : vector<8x256xf32>
    %224 = vector.extract_strided_slice %193 {offsets = [0, 3], sizes = [8, 1], strides = [1, 1]} : vector<8x9xf32> to vector<8x1xf32>
    %225 = vector.broadcast %224 : vector<8x1xf32> to vector<8x256xf32>
    %226 = arith.mulf %225, %223 : vector<8x256xf32>
    %227 = arith.addf %219, %226 : vector<8x256xf32>
    %228 = vector.extract_strided_slice %193 {offsets = [0, 4], sizes = [8, 1], strides = [1, 1]} : vector<8x9xf32> to vector<8x1xf32>
    %229 = vector.broadcast %228 : vector<8x1xf32> to vector<8x256xf32>
    %230 = arith.mulf %229, %192 : vector<8x256xf32>
    %231 = arith.addf %227, %230 : vector<8x256xf32>
    %c255_i32_35 = arith.constant 255 : i32
    %232 = tpu.dynamic_rotate %192 by %c255_i32_35 dim 1 : vector<8x256xf32>, i32 -> vector<8x256xf32>
    %233 = vector.extract_strided_slice %2 {offsets = [5, 0], sizes = [1, 256], strides = [1, 1]} : vector<9x256xf32> to vector<1x256xf32>
    %234 = vector.broadcast %233 : vector<1x256xf32> to vector<8x256xf32>
    %235 = arith.mulf %232, %234 : vector<8x256xf32>
    %236 = vector.extract_strided_slice %193 {offsets = [0, 5], sizes = [8, 1], strides = [1, 1]} : vector<8x9xf32> to vector<8x1xf32>
    %237 = vector.broadcast %236 : vector<8x1xf32> to vector<8x256xf32>
    %238 = arith.mulf %237, %235 : vector<8x256xf32>
    %239 = arith.addf %231, %238 : vector<8x256xf32>
    %c241_i32_36 = arith.constant 241 : i32
    %240 = tpu.dynamic_rotate %192 by %c241_i32_36 dim 1 : vector<8x256xf32>, i32 -> vector<8x256xf32>
    %241 = vector.extract_strided_slice %2 {offsets = [6, 0], sizes = [1, 256], strides = [1, 1]} : vector<9x256xf32> to vector<1x256xf32>
    %242 = vector.broadcast %241 : vector<1x256xf32> to vector<8x256xf32>
    %243 = arith.mulf %240, %242 : vector<8x256xf32>
    %244 = vector.extract_strided_slice %193 {offsets = [0, 6], sizes = [8, 1], strides = [1, 1]} : vector<8x9xf32> to vector<8x1xf32>
    %245 = vector.broadcast %244 : vector<8x1xf32> to vector<8x256xf32>
    %246 = arith.mulf %245, %243 : vector<8x256xf32>
    %247 = arith.addf %239, %246 : vector<8x256xf32>
    %c240_i32_37 = arith.constant 240 : i32
    %248 = tpu.dynamic_rotate %192 by %c240_i32_37 dim 1 : vector<8x256xf32>, i32 -> vector<8x256xf32>
    %249 = vector.extract_strided_slice %2 {offsets = [7, 0], sizes = [1, 256], strides = [1, 1]} : vector<9x256xf32> to vector<1x256xf32>
    %250 = vector.broadcast %249 : vector<1x256xf32> to vector<8x256xf32>
    %251 = arith.mulf %248, %250 : vector<8x256xf32>
    %252 = vector.extract_strided_slice %193 {offsets = [0, 7], sizes = [8, 1], strides = [1, 1]} : vector<8x9xf32> to vector<8x1xf32>
    %253 = vector.broadcast %252 : vector<8x1xf32> to vector<8x256xf32>
    %254 = arith.mulf %253, %251 : vector<8x256xf32>
    %255 = arith.addf %247, %254 : vector<8x256xf32>
    %c239_i32_38 = arith.constant 239 : i32
    %256 = tpu.dynamic_rotate %192 by %c239_i32_38 dim 1 : vector<8x256xf32>, i32 -> vector<8x256xf32>
    %257 = vector.extract_strided_slice %2 {offsets = [8, 0], sizes = [1, 256], strides = [1, 1]} : vector<9x256xf32> to vector<1x256xf32>
    %258 = vector.broadcast %257 : vector<1x256xf32> to vector<8x256xf32>
    %259 = arith.mulf %256, %258 : vector<8x256xf32>
    %260 = vector.extract_strided_slice %193 {offsets = [0, 8], sizes = [8, 1], strides = [1, 1]} : vector<8x9xf32> to vector<8x1xf32>
    %261 = vector.broadcast %260 : vector<8x1xf32> to vector<8x256xf32>
    %262 = arith.mulf %261, %259 : vector<8x256xf32>
    %263 = arith.addf %255, %262 : vector<8x256xf32>
    %264 = vector.broadcast %194 : vector<8x1xf32> to vector<8x256xf32>
    %265 = arith.addf %263, %264 : vector<8x256xf32>
    %cst_39 = arith.constant 0.000000e+00 : f32
    %266 = vector.broadcast %cst_39 : f32 to vector<8x256xf32>
    %267 = arith.maximumf %265, %266 : vector<8x256xf32>
    %cst_40 = arith.constant dense<0.000000e+00> : vector<8xf32>
    %268 = vector.multi_reduction <add>, %267, %cst_40 [1] : vector<8x256xf32> to vector<8xf32>
    %269 = vector.shape_cast %268 : vector<8xf32> to vector<8x1xf32>
    %cst_41 = arith.constant 2.560000e+02 : f32
    %270 = vector.broadcast %cst_41 : f32 to vector<8x1xf32>
    %271 = arith.divf %269, %270 : vector<8x1xf32>
    %c0_42 = arith.constant 0 : index
    %c0_43 = arith.constant 0 : index
    %272 = vector.load %arg13[%c0_42, %c0_43] : memref<2x8xf32, #tpu.memory_space<vmem>>, vector<2x8xf32>
    %c0_44 = arith.constant 0 : index
    %c0_45 = arith.constant 0 : index
    %273 = vector.load %arg15[%c0_44, %c0_45] : memref<8x2xf32, #tpu.memory_space<vmem>>, vector<8x2xf32>
    %c0_46 = arith.constant 0 : index
    %c0_47 = arith.constant 0 : index
    %274 = vector.load %arg14[%c0_46, %c0_47] : memref<2x1xf32, #tpu.memory_space<vmem>>, vector<2x1xf32>
    %275 = vector.extract_strided_slice %272 {offsets = [0, 0], sizes = [2, 1], strides = [1, 1]} : vector<2x8xf32> to vector<2x1xf32>
    %276 = vector.extract_strided_slice %271 {offsets = [0, 0], sizes = [1, 1], strides = [1, 1]} : vector<8x1xf32> to vector<1x1xf32>
    %277 = vector.broadcast %276 : vector<1x1xf32> to vector<2x1xf32>
    %278 = arith.mulf %275, %277 : vector<2x1xf32>
    %279 = arith.addf %274, %278 : vector<2x1xf32>
    %280 = vector.extract_strided_slice %272 {offsets = [0, 1], sizes = [2, 1], strides = [1, 1]} : vector<2x8xf32> to vector<2x1xf32>
    %281 = vector.extract_strided_slice %271 {offsets = [1, 0], sizes = [1, 1], strides = [1, 1]} : vector<8x1xf32> to vector<1x1xf32>
    %282 = vector.broadcast %281 : vector<1x1xf32> to vector<2x1xf32>
    %283 = arith.mulf %280, %282 : vector<2x1xf32>
    %284 = arith.addf %279, %283 : vector<2x1xf32>
    %285 = vector.extract_strided_slice %272 {offsets = [0, 2], sizes = [2, 1], strides = [1, 1]} : vector<2x8xf32> to vector<2x1xf32>
    %286 = vector.extract_strided_slice %271 {offsets = [2, 0], sizes = [1, 1], strides = [1, 1]} : vector<8x1xf32> to vector<1x1xf32>
    %287 = vector.broadcast %286 : vector<1x1xf32> to vector<2x1xf32>
    %288 = arith.mulf %285, %287 : vector<2x1xf32>
    %289 = arith.addf %284, %288 : vector<2x1xf32>
    %290 = vector.extract_strided_slice %272 {offsets = [0, 3], sizes = [2, 1], strides = [1, 1]} : vector<2x8xf32> to vector<2x1xf32>
    %291 = vector.extract_strided_slice %271 {offsets = [3, 0], sizes = [1, 1], strides = [1, 1]} : vector<8x1xf32> to vector<1x1xf32>
    %292 = vector.broadcast %291 : vector<1x1xf32> to vector<2x1xf32>
    %293 = arith.mulf %290, %292 : vector<2x1xf32>
    %294 = arith.addf %289, %293 : vector<2x1xf32>
    %295 = vector.extract_strided_slice %272 {offsets = [0, 4], sizes = [2, 1], strides = [1, 1]} : vector<2x8xf32> to vector<2x1xf32>
    %296 = vector.extract_strided_slice %271 {offsets = [4, 0], sizes = [1, 1], strides = [1, 1]} : vector<8x1xf32> to vector<1x1xf32>
    %297 = vector.broadcast %296 : vector<1x1xf32> to vector<2x1xf32>
    %298 = arith.mulf %295, %297 : vector<2x1xf32>
    %299 = arith.addf %294, %298 : vector<2x1xf32>
    %300 = vector.extract_strided_slice %272 {offsets = [0, 5], sizes = [2, 1], strides = [1, 1]} : vector<2x8xf32> to vector<2x1xf32>
    %301 = vector.extract_strided_slice %271 {offsets = [5, 0], sizes = [1, 1], strides = [1, 1]} : vector<8x1xf32> to vector<1x1xf32>
    %302 = vector.broadcast %301 : vector<1x1xf32> to vector<2x1xf32>
    %303 = arith.mulf %300, %302 : vector<2x1xf32>
    %304 = arith.addf %299, %303 : vector<2x1xf32>
    %305 = vector.extract_strided_slice %272 {offsets = [0, 6], sizes = [2, 1], strides = [1, 1]} : vector<2x8xf32> to vector<2x1xf32>
    %306 = vector.extract_strided_slice %271 {offsets = [6, 0], sizes = [1, 1], strides = [1, 1]} : vector<8x1xf32> to vector<1x1xf32>
    %307 = vector.broadcast %306 : vector<1x1xf32> to vector<2x1xf32>
    %308 = arith.mulf %305, %307 : vector<2x1xf32>
    %309 = arith.addf %304, %308 : vector<2x1xf32>
    %310 = vector.extract_strided_slice %272 {offsets = [0, 7], sizes = [2, 1], strides = [1, 1]} : vector<2x8xf32> to vector<2x1xf32>
    %311 = vector.extract_strided_slice %271 {offsets = [7, 0], sizes = [1, 1], strides = [1, 1]} : vector<8x1xf32> to vector<1x1xf32>
    %312 = vector.broadcast %311 : vector<1x1xf32> to vector<2x1xf32>
    %313 = arith.mulf %310, %312 : vector<2x1xf32>
    %314 = arith.addf %309, %313 : vector<2x1xf32>
    %cst_48 = arith.constant 0.000000e+00 : f32
    %315 = vector.broadcast %cst_48 : f32 to vector<2x1xf32>
    %316 = arith.maximumf %314, %315 : vector<2x1xf32>
    %c0_49 = arith.constant 0 : index
    %c0_50 = arith.constant 0 : index
    %317 = vector.load %arg16[%c0_49, %c0_50] : memref<8x1xf32, #tpu.memory_space<vmem>>, vector<8x1xf32>
    %318 = vector.extract_strided_slice %273 {offsets = [0, 0], sizes = [8, 1], strides = [1, 1]} : vector<8x2xf32> to vector<8x1xf32>
    %319 = vector.extract_strided_slice %316 {offsets = [0, 0], sizes = [1, 1], strides = [1, 1]} : vector<2x1xf32> to vector<1x1xf32>
    %320 = vector.broadcast %319 : vector<1x1xf32> to vector<8x1xf32>
    %321 = arith.mulf %318, %320 : vector<8x1xf32>
    %322 = arith.addf %317, %321 : vector<8x1xf32>
    %323 = vector.extract_strided_slice %273 {offsets = [0, 1], sizes = [8, 1], strides = [1, 1]} : vector<8x2xf32> to vector<8x1xf32>
    %324 = vector.extract_strided_slice %316 {offsets = [1, 0], sizes = [1, 1], strides = [1, 1]} : vector<2x1xf32> to vector<1x1xf32>
    %325 = vector.broadcast %324 : vector<1x1xf32> to vector<8x1xf32>
    %326 = arith.mulf %323, %325 : vector<8x1xf32>
    %327 = arith.addf %322, %326 : vector<8x1xf32>
    %328 = arith.negf %327 : vector<8x1xf32>
    %329 = math.exp %328 : vector<8x1xf32>
    %cst_51 = arith.constant 1.000000e+00 : f32
    %330 = vector.broadcast %cst_51 : f32 to vector<8x1xf32>
    %331 = arith.addf %330, %329 : vector<8x1xf32>
    %332 = arith.divf %330, %331 : vector<8x1xf32>
    %333 = vector.broadcast %332 : vector<8x1xf32> to vector<8x256xf32>
    %334 = arith.mulf %267, %333 : vector<8x256xf32>
    %c0_52 = arith.constant 0 : index
    %c0_53 = arith.constant 0 : index
    %335 = vector.load %arg17[%c0_52, %c0_53] : memref<8x8xf32, #tpu.memory_space<vmem>>, vector<8x8xf32>
    %c0_54 = arith.constant 0 : index
    %c0_55 = arith.constant 0 : index
    %336 = vector.load %arg18[%c0_54, %c0_55] : memref<8x1xf32, #tpu.memory_space<vmem>>, vector<8x1xf32>
    %cst_56 = arith.constant 0.000000e+00 : f32
    %337 = vector.broadcast %cst_56 : f32 to vector<8x256xf32>
    %338 = vector.extract_strided_slice %335 {offsets = [0, 0], sizes = [8, 1], strides = [1, 1]} : vector<8x8xf32> to vector<8x1xf32>
    %339 = vector.extract_strided_slice %334 {offsets = [0, 0], sizes = [1, 256], strides = [1, 1]} : vector<8x256xf32> to vector<1x256xf32>
    %340 = vector.broadcast %338 : vector<8x1xf32> to vector<8x256xf32>
    %341 = vector.broadcast %339 : vector<1x256xf32> to vector<8x256xf32>
    %342 = arith.mulf %340, %341 : vector<8x256xf32>
    %343 = arith.addf %337, %342 : vector<8x256xf32>
    %344 = vector.extract_strided_slice %335 {offsets = [0, 1], sizes = [8, 1], strides = [1, 1]} : vector<8x8xf32> to vector<8x1xf32>
    %345 = vector.extract_strided_slice %334 {offsets = [1, 0], sizes = [1, 256], strides = [1, 1]} : vector<8x256xf32> to vector<1x256xf32>
    %346 = vector.broadcast %344 : vector<8x1xf32> to vector<8x256xf32>
    %347 = vector.broadcast %345 : vector<1x256xf32> to vector<8x256xf32>
    %348 = arith.mulf %346, %347 : vector<8x256xf32>
    %349 = arith.addf %343, %348 : vector<8x256xf32>
    %350 = vector.extract_strided_slice %335 {offsets = [0, 2], sizes = [8, 1], strides = [1, 1]} : vector<8x8xf32> to vector<8x1xf32>
    %351 = vector.extract_strided_slice %334 {offsets = [2, 0], sizes = [1, 256], strides = [1, 1]} : vector<8x256xf32> to vector<1x256xf32>
    %352 = vector.broadcast %350 : vector<8x1xf32> to vector<8x256xf32>
    %353 = vector.broadcast %351 : vector<1x256xf32> to vector<8x256xf32>
    %354 = arith.mulf %352, %353 : vector<8x256xf32>
    %355 = arith.addf %349, %354 : vector<8x256xf32>
    %356 = vector.extract_strided_slice %335 {offsets = [0, 3], sizes = [8, 1], strides = [1, 1]} : vector<8x8xf32> to vector<8x1xf32>
    %357 = vector.extract_strided_slice %334 {offsets = [3, 0], sizes = [1, 256], strides = [1, 1]} : vector<8x256xf32> to vector<1x256xf32>
    %358 = vector.broadcast %356 : vector<8x1xf32> to vector<8x256xf32>
    %359 = vector.broadcast %357 : vector<1x256xf32> to vector<8x256xf32>
    %360 = arith.mulf %358, %359 : vector<8x256xf32>
    %361 = arith.addf %355, %360 : vector<8x256xf32>
    %362 = vector.extract_strided_slice %335 {offsets = [0, 4], sizes = [8, 1], strides = [1, 1]} : vector<8x8xf32> to vector<8x1xf32>
    %363 = vector.extract_strided_slice %334 {offsets = [4, 0], sizes = [1, 256], strides = [1, 1]} : vector<8x256xf32> to vector<1x256xf32>
    %364 = vector.broadcast %362 : vector<8x1xf32> to vector<8x256xf32>
    %365 = vector.broadcast %363 : vector<1x256xf32> to vector<8x256xf32>
    %366 = arith.mulf %364, %365 : vector<8x256xf32>
    %367 = arith.addf %361, %366 : vector<8x256xf32>
    %368 = vector.extract_strided_slice %335 {offsets = [0, 5], sizes = [8, 1], strides = [1, 1]} : vector<8x8xf32> to vector<8x1xf32>
    %369 = vector.extract_strided_slice %334 {offsets = [5, 0], sizes = [1, 256], strides = [1, 1]} : vector<8x256xf32> to vector<1x256xf32>
    %370 = vector.broadcast %368 : vector<8x1xf32> to vector<8x256xf32>
    %371 = vector.broadcast %369 : vector<1x256xf32> to vector<8x256xf32>
    %372 = arith.mulf %370, %371 : vector<8x256xf32>
    %373 = arith.addf %367, %372 : vector<8x256xf32>
    %374 = vector.extract_strided_slice %335 {offsets = [0, 6], sizes = [8, 1], strides = [1, 1]} : vector<8x8xf32> to vector<8x1xf32>
    %375 = vector.extract_strided_slice %334 {offsets = [6, 0], sizes = [1, 256], strides = [1, 1]} : vector<8x256xf32> to vector<1x256xf32>
    %376 = vector.broadcast %374 : vector<8x1xf32> to vector<8x256xf32>
    %377 = vector.broadcast %375 : vector<1x256xf32> to vector<8x256xf32>
    %378 = arith.mulf %376, %377 : vector<8x256xf32>
    %379 = arith.addf %373, %378 : vector<8x256xf32>
    %380 = vector.extract_strided_slice %335 {offsets = [0, 7], sizes = [8, 1], strides = [1, 1]} : vector<8x8xf32> to vector<8x1xf32>
    %381 = vector.extract_strided_slice %334 {offsets = [7, 0], sizes = [1, 256], strides = [1, 1]} : vector<8x256xf32> to vector<1x256xf32>
    %382 = vector.broadcast %380 : vector<8x1xf32> to vector<8x256xf32>
    %383 = vector.broadcast %381 : vector<1x256xf32> to vector<8x256xf32>
    %384 = arith.mulf %382, %383 : vector<8x256xf32>
    %385 = arith.addf %379, %384 : vector<8x256xf32>
    %386 = vector.broadcast %336 : vector<8x1xf32> to vector<8x256xf32>
    %387 = arith.addf %385, %386 : vector<8x256xf32>
    %388 = arith.addf %387, %137 : vector<8x256xf32>
    %c0_57 = arith.constant 0 : index
    %c0_58 = arith.constant 0 : index
    %c0_59 = arith.constant 0 : index
    %389 = vector.load %arg19[%c0_57, %c0_58, %c0_59] : memref<1x8x256xf32, #tpu.memory_space<vmem>>, vector<1x8x256xf32>
    %390 = vector.shape_cast %389 : vector<1x8x256xf32> to vector<8x256xf32>
    %391 = vector.shape_cast %388 : vector<8x256xf32> to vector<1x8x256xf32>
    tpu.vector_store %arg19[%c0_57, %c0_58, %c0_59], %391 {strides = array<i32>} : memref<1x8x256xf32, #tpu.memory_space<vmem>>, vector<1x8x256xf32>,
    return
  }
  func.func @transform_0(%arg0: i32) -> (i32, i32, i32) {
    %c0_i32 = arith.constant 0 : i32
    %c0_i32_0 = arith.constant 0 : i32
    %c0_i32_1 = arith.constant 0 : i32
    return %arg0, %c0_i32, %c0_i32_0 : i32, i32, i32
  }
  func.func @transform_1(%arg0: i32) -> (i32, i32) {
    %c0_i32 = arith.constant 0 : i32
    %c0_i32_0 = arith.constant 0 : i32
    %c0_i32_1 = arith.constant 0 : i32
    return %c0_i32, %c0_i32_0 : i32, i32
  }
  func.func @transform_2(%arg0: i32) -> (i32, i32) {
    %c0_i32 = arith.constant 0 : i32
    %c0_i32_0 = arith.constant 0 : i32
    %c0_i32_1 = arith.constant 0 : i32
    return %c0_i32, %c0_i32_0 : i32, i32
  }
  func.func @transform_3(%arg0: i32) -> (i32, i32) {
    %c0_i32 = arith.constant 0 : i32
    %c0_i32_0 = arith.constant 0 : i32
    %c0_i32_1 = arith.constant 0 : i32
    return %c0_i32, %c0_i32_0 : i32, i32
  }
  func.func @transform_4(%arg0: i32) -> (i32, i32) {
    %c0_i32 = arith.constant 0 : i32
    %c0_i32_0 = arith.constant 0 : i32
    %c0_i32_1 = arith.constant 0 : i32
    return %c0_i32, %c0_i32_0 : i32, i32
  }
  func.func @transform_5(%arg0: i32) -> (i32, i32) {
    %c0_i32 = arith.constant 0 : i32
    %c0_i32_0 = arith.constant 0 : i32
    %c0_i32_1 = arith.constant 0 : i32
    return %c0_i32, %c0_i32_0 : i32, i32
  }
  func.func @transform_6(%arg0: i32) -> (i32, i32) {
    %c0_i32 = arith.constant 0 : i32
    %c0_i32_0 = arith.constant 0 : i32
    %c0_i32_1 = arith.constant 0 : i32
    return %c0_i32, %c0_i32_0 : i32, i32
  }
  func.func @transform_7(%arg0: i32) -> (i32, i32) {
    %c0_i32 = arith.constant 0 : i32
    %c0_i32_0 = arith.constant 0 : i32
    %c0_i32_1 = arith.constant 0 : i32
    return %c0_i32, %c0_i32_0 : i32, i32
  }
  func.func @transform_8(%arg0: i32) -> (i32, i32) {
    %c0_i32 = arith.constant 0 : i32
    %c0_i32_0 = arith.constant 0 : i32
    %c0_i32_1 = arith.constant 0 : i32
    return %c0_i32, %c0_i32_0 : i32, i32
  }
  func.func @transform_9(%arg0: i32) -> (i32, i32) {
    %c0_i32 = arith.constant 0 : i32
    %c0_i32_0 = arith.constant 0 : i32
    %c0_i32_1 = arith.constant 0 : i32
    return %c0_i32, %c0_i32_0 : i32, i32
  }
  func.func @transform_10(%arg0: i32) -> (i32, i32) {
    %c0_i32 = arith.constant 0 : i32
    %c0_i32_0 = arith.constant 0 : i32
    %c0_i32_1 = arith.constant 0 : i32
    return %c0_i32, %c0_i32_0 : i32, i32
  }
  func.func @transform_11(%arg0: i32) -> (i32, i32) {
    %c0_i32 = arith.constant 0 : i32
    %c0_i32_0 = arith.constant 0 : i32
    %c0_i32_1 = arith.constant 0 : i32
    return %c0_i32, %c0_i32_0 : i32, i32
  }
  func.func @transform_12(%arg0: i32) -> (i32, i32) {
    %c0_i32 = arith.constant 0 : i32
    %c0_i32_0 = arith.constant 0 : i32
    %c0_i32_1 = arith.constant 0 : i32
    return %c0_i32, %c0_i32_0 : i32, i32
  }
  func.func @transform_13(%arg0: i32) -> (i32, i32) {
    %c0_i32 = arith.constant 0 : i32
    %c0_i32_0 = arith.constant 0 : i32
    %c0_i32_1 = arith.constant 0 : i32
    return %c0_i32, %c0_i32_0 : i32, i32
  }
  func.func @transform_14(%arg0: i32) -> (i32, i32) {
    %c0_i32 = arith.constant 0 : i32
    %c0_i32_0 = arith.constant 0 : i32
    %c0_i32_1 = arith.constant 0 : i32
    return %c0_i32, %c0_i32_0 : i32, i32
  }
  func.func @transform_15(%arg0: i32) -> (i32, i32) {
    %c0_i32 = arith.constant 0 : i32
    %c0_i32_0 = arith.constant 0 : i32
    %c0_i32_1 = arith.constant 0 : i32
    return %c0_i32, %c0_i32_0 : i32, i32
  }
  func.func @transform_16(%arg0: i32) -> (i32, i32) {
    %c0_i32 = arith.constant 0 : i32
    %c0_i32_0 = arith.constant 0 : i32
    %c0_i32_1 = arith.constant 0 : i32
    return %c0_i32, %c0_i32_0 : i32, i32
  }
  func.func @transform_17(%arg0: i32) -> (i32, i32) {
    %c0_i32 = arith.constant 0 : i32
    %c0_i32_0 = arith.constant 0 : i32
    %c0_i32_1 = arith.constant 0 : i32
    return %c0_i32, %c0_i32_0 : i32, i32
  }
  func.func @transform_18(%arg0: i32) -> (i32, i32, i32) {
    %c0_i32 = arith.constant 0 : i32
    %c0_i32_0 = arith.constant 0 : i32
    %c0_i32_1 = arith.constant 0 : i32
    return %arg0, %c0_i32, %c0_i32_0 : i32, i32, i32
  }
}

</mosaic_0001>

<llo_original>
// kernel: tpu_custom_call.1
$region0: #{tpu_custom_call.1}
  #allocation0 [shape = 'u32[]', space=smem, size = 0x4, offset = 0x4, fixed_abs, tag = 'smem constant byte address 0x4 - core index']
  #allocation1 [shape = 'u32[144,128]{1,0:T(1,128)}', space=vmem, size = 0x12000, scoped, tag = 'internal scratch']
  %s0 = inlined_call_operand.vmem [shape: f32[2,4,256], index: 0, kind: input, shape index: {}]
  %s1 = inlined_call_operand.vmem [shape: f32[9,256], index: 1, kind: input, shape index: {}]
  %s2 = inlined_call_operand.vmem [shape: f32[4,4], index: 2, kind: input, shape index: {}]
  %s3 = inlined_call_operand.vmem [shape: f32[4,1], index: 3, kind: input, shape index: {}]
  %s4 = inlined_call_operand.vmem [shape: f32[4,9], index: 4, kind: input, shape index: {}]
  %s5 = inlined_call_operand.vmem [shape: f32[4,1], index: 5, kind: input, shape index: {}]
  %s6 = inlined_call_operand.vmem [shape: f32[8,4], index: 6, kind: input, shape index: {}]
  %s7 = inlined_call_operand.vmem [shape: f32[8,1], index: 7, kind: input, shape index: {}]
  %s8 = inlined_call_operand.vmem [shape: f32[8,8], index: 8, kind: input, shape index: {}]
  %s9 = inlined_call_operand.vmem [shape: f32[8,1], index: 9, kind: input, shape index: {}]
  %s10 = inlined_call_operand.vmem [shape: f32[8,9], index: 10, kind: input, shape index: {}]
  %s11 = inlined_call_operand.vmem [shape: f32[8,1], index: 11, kind: input, shape index: {}]
  %s12 = inlined_call_operand.vmem [shape: f32[2,8], index: 12, kind: input, shape index: {}]
  %s13 = inlined_call_operand.vmem [shape: f32[2,1], index: 13, kind: input, shape index: {}]
  %s14 = inlined_call_operand.vmem [shape: f32[8,2], index: 14, kind: input, shape index: {}]
  %s15 = inlined_call_operand.vmem [shape: f32[8,1], index: 15, kind: input, shape index: {}]
  %s16 = inlined_call_operand.vmem [shape: f32[8,8], index: 16, kind: input, shape index: {}]
  %s17 = inlined_call_operand.vmem [shape: f32[8,1], index: 17, kind: input, shape index: {}]
  %s18 = inlined_call_operand.hbm [shape: f32[2,8,256], index: 18, kind: output, shape index: {}]
  %s19 = sld [smem:[#allocation0]]
  $region105: #{tpu_custom_call.1} parent=0
    _
  %s21 = ssub.s32 1, %s19
  %s22 = scalar_select 0, %s21, %s19
  $region1: #{tpu_custom_call.1} parent=0
    #allocation2 [shape = 'u8[16384]{0}', space=vmem, size = 0x4000, scoped, tag = 'output window, operand 0']
    #allocation3 [shape = 's32[2]{0}', space=sflag, size = 0x8, scoped, tag = 'scoped memory for tpu_custom_call.1']
    %23 = vsyncpa [#allocation3], 0
    %s24 = scalar_lea.sflag [#allocation3], 1
    %25 = vsyncpa %s24, 0
    loop: start=0, step=1, limit=4
    $region2: #{tpu_custom_call.1} parent=1 // loop_pre_header
      _
    $region3: #{tpu_custom_call.1} parent=1 // loop_header
      %s27 = sphi 0, %s31
      %p28 = scmp.ge.s32.totalorder %s27, 4
      %s37 = sphi 0, %s39
      %s40 = sphi 0, %s37
      %s41 = sphi 0, %s40
      %s57 = sphi 0, %s41
      %s61 = sphi 0, %s61
      %s63 = sphi 0, %s61
      %s64 = sphi 0, %s63
      %s78 = sphi 0, %s64
      %s82 = sphi 0, %s82
      %s84 = sphi 0, %s82
      %s85 = sphi 0, %s84
      %s99 = sphi 0, %s85
      %s103 = sphi 0, %s103
      %s105 = sphi 0, %s103
      %s106 = sphi 0, %s105
      %s120 = sphi 0, %s106
      %s124 = sphi 0, %s124
      %s126 = sphi 0, %s124
      %s127 = sphi 0, %s126
      %s141 = sphi 0, %s127
      %s145 = sphi 0, %s145
      %s147 = sphi 0, %s145
      %s148 = sphi 0, %s147
      %s162 = sphi 0, %s148
      %s166 = sphi 0, %s166
      %s168 = sphi 0, %s166
      %s169 = sphi 0, %s168
      %s183 = sphi 0, %s169
      %s187 = sphi 0, %s187
      %s189 = sphi 0, %s187
      %s190 = sphi 0, %s189
      %s204 = sphi 0, %s190
      %s208 = sphi 0, %s208
      %s210 = sphi 0, %s208
      %s211 = sphi 0, %s210
      %s225 = sphi 0, %s211
      %s229 = sphi 0, %s229
      %s231 = sphi 0, %s229
      %s232 = sphi 0, %s231
      %s246 = sphi 0, %s232
      %s250 = sphi 0, %s250
      %s252 = sphi 0, %s250
      %s253 = sphi 0, %s252
      %s267 = sphi 0, %s253
      %s271 = sphi 0, %s271
      %s273 = sphi 0, %s271
      %s274 = sphi 0, %s273
      %s288 = sphi 0, %s274
      %s292 = sphi 0, %s292
      %s294 = sphi 0, %s292
      %s295 = sphi 0, %s294
      %s309 = sphi 0, %s295
      %s313 = sphi 0, %s313
      %s315 = sphi 0, %s313
      %s316 = sphi 0, %s315
      %s330 = sphi 0, %s316
      %s334 = sphi 0, %s334
      %s336 = sphi 0, %s334
      %s337 = sphi 0, %s336
      %s351 = sphi 0, %s337
      %s355 = sphi 0, %s355
      %s357 = sphi 0, %s355
      %s358 = sphi 0, %s357
      %s372 = sphi 0, %s358
      %s376 = sphi 0, %s376
      %s378 = sphi 0, %s376
      %s379 = sphi 0, %s378
      %s393 = sphi 0, %s379
      %s397 = sphi 0, %s397
      %s399 = sphi 0, %s397
      %s400 = sphi 0, %s399
      %s414 = sphi 0, %s400
      %s420 = sphi 0, %s422
      %s423 = sphi 0, %s420
      %s424 = sphi 0, %s423
      %s440 = sphi 0, %s424
    $region4: #{tpu_custom_call.1} parent=1 // loop_header_branch
      %30 = sbr.rel (%p28) target = $region8
    $region5: #{tpu_custom_call.1} parent=1 // loop_body
      %s32 = ssub.s32 %s27, 1
      %s33 = ssub.s32 %s27, 2
      %s34 = sadd.s32 %s27, 1
      %s35 = ssub.s32 %s27, %s34
      %p36 = scmp.eq.s32.totalorder %s35, 0
      %s38 = sadd.s32 %s37, 1
      %s39 = scalar_select %p36, %s37, %s38
      %p42 = pneg %p36
      %p43 = scmp.eq.s32.totalorder %s27, 1
      %p44 = por %p42, %p43
      %p45 = scmp.ne.s32.totalorder %s37, %s40
      %p46 = scmp.eq.s32.totalorder %s27, 0
      %p47 = por %p45, %p46
      %p48 = scmp.ne.s32.totalorder %s37, %s40
      %p49 = scmp.eq.s32.totalorder %s32, 1
      %p50 = por %p48, %p49
      %p51 = scmp.ne.s32.totalorder %s40, %s41
      %p52 = scmp.eq.s32.totalorder %s32, 0
      %p53 = por %p51, %p52
      %p54 = scmp.ne.s32.totalorder %s40, %s41
      %p55 = scmp.eq.s32.totalorder %s33, 1
      %p56 = por %p54, %p55
      %p58 = scmp.ne.s32.totalorder %s41, %s57
      %p59 = scmp.eq.s32.totalorder %s33, 0
      %p60 = por %p58, %p59
      %s62 = sadd.s32 %s61, 1
      %p65 = scmp.eq.s32.totalorder %s27, 1
      %p66 = scmp.ne.s32.totalorder %s61, %s63
      %p67 = scmp.eq.s32.totalorder %s27, 0
      %p68 = por %p66, %p67
      %p69 = scmp.ne.s32.totalorder %s61, %s63
      %p70 = scmp.eq.s32.totalorder %s32, 1
      %p71 = por %p69, %p70
      %p72 = scmp.ne.s32.totalorder %s63, %s64
      %p73 = scmp.eq.s32.totalorder %s32, 0
      %p74 = por %p72, %p73
      %p75 = scmp.ne.s32.totalorder %s63, %s64
      %p76 = scmp.eq.s32.totalorder %s33, 1
      %p77 = por %p75, %p76
      %p79 = scmp.ne.s32.totalorder %s64, %s78
      %p80 = scmp.eq.s32.totalorder %s33, 0
      %p81 = por %p79, %p80
      %s83 = sadd.s32 %s82, 1
      %p86 = scmp.eq.s32.totalorder %s27, 1
      %p87 = scmp.ne.s32.totalorder %s82, %s84
      %p88 = scmp.eq.s32.totalorder %s27, 0
      %p89 = por %p87, %p88
      %p90 = scmp.ne.s32.totalorder %s82, %s84
      %p91 = scmp.eq.s32.totalorder %s32, 1
      %p92 = por %p90, %p91
      %p93 = scmp.ne.s32.totalorder %s84, %s85
      %p94 = scmp.eq.s32.totalorder %s32, 0
      %p95 = por %p93, %p94
      %p96 = scmp.ne.s32.totalorder %s84, %s85
      %p97 = scmp.eq.s32.totalorder %s33, 1
      %p98 = por %p96, %p97
      %p100 = scmp.ne.s32.totalorder %s85, %s99
      %p101 = scmp.eq.s32.totalorder %s33, 0
      %p102 = por %p100, %p101
      %s104 = sadd.s32 %s103, 1
      %p107 = scmp.eq.s32.totalorder %s27, 1
      %p108 = scmp.ne.s32.totalorder %s103, %s105
      %p109 = scmp.eq.s32.totalorder %s27, 0
      %p110 = por %p108, %p109
      %p111 = scmp.ne.s32.totalorder %s103, %s105
      %p112 = scmp.eq.s32.totalorder %s32, 1
      %p113 = por %p111, %p112
      %p114 = scmp.ne.s32.totalorder %s105, %s106
      %p115 = scmp.eq.s32.totalorder %s32, 0
      %p116 = por %p114, %p115
      %p117 = scmp.ne.s32.totalorder %s105, %s106
      %p118 = scmp.eq.s32.totalorder %s33, 1
      %p119 = por %p117, %p118
      %p121 = scmp.ne.s32.totalorder %s106, %s120
      %p122 = scmp.eq.s32.totalorder %s33, 0
      %p123 = por %p121, %p122
      %s125 = sadd.s32 %s124, 1
      %p128 = scmp.eq.s32.totalorder %s27, 1
      %p129 = scmp.ne.s32.totalorder %s124, %s126
      %p130 = scmp.eq.s32.totalorder %s27, 0
      %p131 = por %p129, %p130
      %p132 = scmp.ne.s32.totalorder %s124, %s126
      %p133 = scmp.eq.s32.totalorder %s32, 1
      %p134 = por %p132, %p133
      %p135 = scmp.ne.s32.totalorder %s126, %s127
      %p136 = scmp.eq.s32.totalorder %s32, 0
      %p137 = por %p135, %p136
      %p138 = scmp.ne.s32.totalorder %s126, %s127
      %p139 = scmp.eq.s32.totalorder %s33, 1
      %p140 = por %p138, %p139
      %p142 = scmp.ne.s32.totalorder %s127, %s141
      %p143 = scmp.eq.s32.totalorder %s33, 0
      %p144 = por %p142, %p143
      %s146 = sadd.s32 %s145, 1
      %p149 = scmp.eq.s32.totalorder %s27, 1
      %p150 = scmp.ne.s32.totalorder %s145, %s147
      %p151 = scmp.eq.s32.totalorder %s27, 0
      %p152 = por %p150, %p151
      %p153 = scmp.ne.s32.totalorder %s145, %s147
      %p154 = scmp.eq.s32.totalorder %s32, 1
      %p155 = por %p153, %p154
      %p156 = scmp.ne.s32.totalorder %s147, %s148
      %p157 = scmp.eq.s32.totalorder %s32, 0
      %p158 = por %p156, %p157
      %p159 = scmp.ne.s32.totalorder %s147, %s148
      %p160 = scmp.eq.s32.totalorder %s33, 1
      %p161 = por %p159, %p160
      %p163 = scmp.ne.s32.totalorder %s148, %s162
      %p164 = scmp.eq.s32.totalorder %s33, 0
      %p165 = por %p163, %p164
      %s167 = sadd.s32 %s166, 1
      %p170 = scmp.eq.s32.totalorder %s27, 1
      %p171 = scmp.ne.s32.totalorder %s166, %s168
      %p172 = scmp.eq.s32.totalorder %s27, 0
      %p173 = por %p171, %p172
      %p174 = scmp.ne.s32.totalorder %s166, %s168
      %p175 = scmp.eq.s32.totalorder %s32, 1
      %p176 = por %p174, %p175
      %p177 = scmp.ne.s32.totalorder %s168, %s169
      %p178 = scmp.eq.s32.totalorder %s32, 0
      %p179 = por %p177, %p178
      %p180 = scmp.ne.s32.totalorder %s168, %s169
      %p181 = scmp.eq.s32.totalorder %s33, 1
      %p182 = por %p180, %p181
      %p184 = scmp.ne.s32.totalorder %s169, %s183
      %p185 = scmp.eq.s32.totalorder %s33, 0
      %p186 = por %p184, %p185
      %s188 = sadd.s32 %s187, 1
      %p191 = scmp.eq.s32.totalorder %s27, 1
      %p192 = scmp.ne.s32.totalorder %s187, %s189
      %p193 = scmp.eq.s32.totalorder %s27, 0
      %p194 = por %p192, %p193
      %p195 = scmp.ne.s32.totalorder %s187, %s189
      %p196 = scmp.eq.s32.totalorder %s32, 1
      %p197 = por %p195, %p196
      %p198 = scmp.ne.s32.totalorder %s189, %s190
      %p199 = scmp.eq.s32.totalorder %s32, 0
      %p200 = por %p198, %p199
      %p201 = scmp.ne.s32.totalorder %s189, %s190
      %p202 = scmp.eq.s32.totalorder %s33, 1
      %p203 = por %p201, %p202
      %p205 = scmp.ne.s32.totalorder %s190, %s204
      %p206 = scmp.eq.s32.totalorder %s33, 0
      %p207 = por %p205, %p206
      %s209 = sadd.s32 %s208, 1
      %p212 = scmp.eq.s32.totalorder %s27, 1
      %p213 = scmp.ne.s32.totalorder %s208, %s210
      %p214 = scmp.eq.s32.totalorder %s27, 0
      %p215 = por %p213, %p214
      %p216 = scmp.ne.s32.totalorder %s208, %s210
      %p217 = scmp.eq.s32.totalorder %s32, 1
      %p218 = por %p216, %p217
      %p219 = scmp.ne.s32.totalorder %s210, %s211
      %p220 = scmp.eq.s32.totalorder %s32, 0
      %p221 = por %p219, %p220
      %p222 = scmp.ne.s32.totalorder %s210, %s211
      %p223 = scmp.eq.s32.totalorder %s33, 1
      %p224 = por %p222, %p223
      %p226 = scmp.ne.s32.totalorder %s211, %s225
      %p227 = scmp.eq.s32.totalorder %s33, 0
      %p228 = por %p226, %p227
      %s230 = sadd.s32 %s229, 1
      %p233 = scmp.eq.s32.totalorder %s27, 1
      %p234 = scmp.ne.s32.totalorder %s229, %s231
      %p235 = scmp.eq.s32.totalorder %s27, 0
      %p236 = por %p234, %p235
      %p237 = scmp.ne.s32.totalorder %s229, %s231
      %p238 = scmp.eq.s32.totalorder %s32, 1
      %p239 = por %p237, %p238
      %p240 = scmp.ne.s32.totalorder %s231, %s232
      %p241 = scmp.eq.s32.totalorder %s32, 0
      %p242 = por %p240, %p241
      %p243 = scmp.ne.s32.totalorder %s231, %s232
      %p244 = scmp.eq.s32.totalorder %s33, 1
      %p245 = por %p243, %p244
      %p247 = scmp.ne.s32.totalorder %s232, %s246
      %p248 = scmp.eq.s32.totalorder %s33, 0
      %p249 = por %p247, %p248
      %s251 = sadd.s32 %s250, 1
      %p254 = scmp.eq.s32.totalorder %s27, 1
      %p255 = scmp.ne.s32.totalorder %s250, %s252
      %p256 = scmp.eq.s32.totalorder %s27, 0
      %p257 = por %p255, %p256
      %p258 = scmp.ne.s32.totalorder %s250, %s252
      %p259 = scmp.eq.s32.totalorder %s32, 1
      %p260 = por %p258, %p259
      %p261 = scmp.ne.s32.totalorder %s252, %s253
      %p262 = scmp.eq.s32.totalorder %s32, 0
      %p263 = por %p261, %p262
      %p264 = scmp.ne.s32.totalorder %s252, %s253
      %p265 = scmp.eq.s32.totalorder %s33, 1
      %p266 = por %p264, %p265
      %p268 = scmp.ne.s32.totalorder %s253, %s267
      %p269 = scmp.eq.s32.totalorder %s33, 0
      %p270 = por %p268, %p269
      %s272 = sadd.s32 %s271, 1
      %p275 = scmp.eq.s32.totalorder %s27, 1
      %p276 = scmp.ne.s32.totalorder %s271, %s273
      %p277 = scmp.eq.s32.totalorder %s27, 0
      %p278 = por %p276, %p277
      %p279 = scmp.ne.s32.totalorder %s271, %s273
      %p280 = scmp.eq.s32.totalorder %s32, 1
      %p281 = por %p279, %p280
      %p282 = scmp.ne.s32.totalorder %s273, %s274
      %p283 = scmp.eq.s32.totalorder %s32, 0
      %p284 = por %p282, %p283
      %p285 = scmp.ne.s32.totalorder %s273, %s274
      %p286 = scmp.eq.s32.totalorder %s33, 1
      %p287 = por %p285, %p286
      %p289 = scmp.ne.s32.totalorder %s274, %s288
      %p290 = scmp.eq.s32.totalorder %s33, 0
      %p291 = por %p289, %p290
      %s293 = sadd.s32 %s292, 1
      %p296 = scmp.eq.s32.totalorder %s27, 1
      %p297 = scmp.ne.s32.totalorder %s292, %s294
      %p298 = scmp.eq.s32.totalorder %s27, 0
      %p299 = por %p297, %p298
      %p300 = scmp.ne.s32.totalorder %s292, %s294
      %p301 = scmp.eq.s32.totalorder %s32, 1
      %p302 = por %p300, %p301
      %p303 = scmp.ne.s32.totalorder %s294, %s295
      %p304 = scmp.eq.s32.totalorder %s32, 0
      %p305 = por %p303, %p304
      %p306 = scmp.ne.s32.totalorder %s294, %s295
      %p307 = scmp.eq.s32.totalorder %s33, 1
      %p308 = por %p306, %p307
      %p310 = scmp.ne.s32.totalorder %s295, %s309
      %p311 = scmp.eq.s32.totalorder %s33, 0
      %p312 = por %p310, %p311
      %s314 = sadd.s32 %s313, 1
      %p317 = scmp.eq.s32.totalorder %s27, 1
      %p318 = scmp.ne.s32.totalorder %s313, %s315
      %p319 = scmp.eq.s32.totalorder %s27, 0
      %p320 = por %p318, %p319
      %p321 = scmp.ne.s32.totalorder %s313, %s315
      %p322 = scmp.eq.s32.totalorder %s32, 1
      %p323 = por %p321, %p322
      %p324 = scmp.ne.s32.totalorder %s315, %s316
      %p325 = scmp.eq.s32.totalorder %s32, 0
      %p326 = por %p324, %p325
      %p327 = scmp.ne.s32.totalorder %s315, %s316
      %p328 = scmp.eq.s32.totalorder %s33, 1
      %p329 = por %p327, %p328
      %p331 = scmp.ne.s32.totalorder %s316, %s330
      %p332 = scmp.eq.s32.totalorder %s33, 0
      %p333 = por %p331, %p332
      %s335 = sadd.s32 %s334, 1
      %p338 = scmp.eq.s32.totalorder %s27, 1
      %p339 = scmp.ne.s32.totalorder %s334, %s336
      %p340 = scmp.eq.s32.totalorder %s27, 0
      %p341 = por %p339, %p340
      %p342 = scmp.ne.s32.totalorder %s334, %s336
      %p343 = scmp.eq.s32.totalorder %s32, 1
      %p344 = por %p342, %p343
      %p345 = scmp.ne.s32.totalorder %s336, %s337
      %p346 = scmp.eq.s32.totalorder %s32, 0
      %p347 = por %p345, %p346
      %p348 = scmp.ne.s32.totalorder %s336, %s337
      %p349 = scmp.eq.s32.totalorder %s33, 1
      %p350 = por %p348, %p349
      %p352 = scmp.ne.s32.totalorder %s337, %s351
      %p353 = scmp.eq.s32.totalorder %s33, 0
      %p354 = por %p352, %p353
      %s356 = sadd.s32 %s355, 1
      %p359 = scmp.eq.s32.totalorder %s27, 1
      %p360 = scmp.ne.s32.totalorder %s355, %s357
      %p361 = scmp.eq.s32.totalorder %s27, 0
      %p362 = por %p360, %p361
      %p363 = scmp.ne.s32.totalorder %s355, %s357
      %p364 = scmp.eq.s32.totalorder %s32, 1
      %p365 = por %p363, %p364
      %p366 = scmp.ne.s32.totalorder %s357, %s358
      %p367 = scmp.eq.s32.totalorder %s32, 0
      %p368 = por %p366, %p367
      %p369 = scmp.ne.s32.totalorder %s357, %s358
      %p370 = scmp.eq.s32.totalorder %s33, 1
      %p371 = por %p369, %p370
      %p373 = scmp.ne.s32.totalorder %s358, %s372
      %p374 = scmp.eq.s32.totalorder %s33, 0
      %p375 = por %p373, %p374
      %s377 = sadd.s32 %s376, 1
      %p380 = scmp.eq.s32.totalorder %s27, 1
      %p381 = scmp.ne.s32.totalorder %s376, %s378
      %p382 = scmp.eq.s32.totalorder %s27, 0
      %p383 = por %p381, %p382
      %p384 = scmp.ne.s32.totalorder %s376, %s378
      %p385 = scmp.eq.s32.totalorder %s32, 1
      %p386 = por %p384, %p385
      %p387 = scmp.ne.s32.totalorder %s378, %s379
      %p388 = scmp.eq.s32.totalorder %s32, 0
      %p389 = por %p387, %p388
      %p390 = scmp.ne.s32.totalorder %s378, %s379
      %p391 = scmp.eq.s32.totalorder %s33, 1
      %p392 = por %p390, %p391
      %p394 = scmp.ne.s32.totalorder %s379, %s393
      %p395 = scmp.eq.s32.totalorder %s33, 0
      %p396 = por %p394, %p395
      %s398 = sadd.s32 %s397, 1
      %p401 = scmp.eq.s32.totalorder %s27, 1
      %p402 = scmp.ne.s32.totalorder %s397, %s399
      %p403 = scmp.eq.s32.totalorder %s27, 0
      %p404 = por %p402, %p403
      %p405 = scmp.ne.s32.totalorder %s397, %s399
      %p406 = scmp.eq.s32.totalorder %s32, 1
      %p407 = por %p405, %p406
      %p408 = scmp.ne.s32.totalorder %s399, %s400
      %p409 = scmp.eq.s32.totalorder %s32, 0
      %p410 = por %p408, %p409
      %p411 = scmp.ne.s32.totalorder %s399, %s400
      %p412 = scmp.eq.s32.totalorder %s33, 1
      %p413 = por %p411, %p412
      %p415 = scmp.ne.s32.totalorder %s400, %s414
      %p416 = scmp.eq.s32.totalorder %s33, 0
      %p417 = por %p415, %p416
      %s418 = ssub.s32 %s27, %s34
      %p419 = scmp.eq.s32.totalorder %s418, 0
      %s421 = sadd.s32 %s420, 1
      %s422 = scalar_select %p419, %s420, %s421
      %p425 = pneg %p419
      %p426 = scmp.eq.s32.totalorder %s27, 1
      %p427 = por %p425, %p426
      %p428 = scmp.ne.s32.totalorder %s420, %s423
      %p429 = scmp.eq.s32.totalorder %s27, 0
      %p430 = por %p428, %p429
      %p431 = scmp.ne.s32.totalorder %s420, %s423
      %p432 = scmp.eq.s32.totalorder %s32, 1
      %p433 = por %p431, %p432
      %p434 = scmp.ne.s32.totalorder %s423, %s424
      %p435 = scmp.eq.s32.totalorder %s32, 0
      %p436 = por %p434, %p435
      %p437 = scmp.ne.s32.totalorder %s423, %s424
      %p438 = scmp.eq.s32.totalorder %s33, 1
      %p439 = por %p437, %p438
      %p441 = scmp.ne.s32.totalorder %s424, %s440
      %p442 = scmp.eq.s32.totalorder %s33, 0
      %p443 = por %p441, %p442
      %p444 = scmp.le.s32.totalorder 1, %s27
      %p445 = scmp.lt.s32.totalorder %s27, 3
      %p446 = pnand %p444, %p445
      %p447 = pneg %p446
      // Predicated region
      $region9: #{tpu_custom_call.1} parent=5 // pred_check
        _
      $region10: #{tpu_custom_call.1} parent=5 // pred_check_branch
        %449 = sbr.rel (%p446) target = $region12
      $region11: #{tpu_custom_call.1} parent=5 // pred_region
        %s450 = ssub.s32 %s27, 1
        // Predicated region
        $region13: #{tpu_custom_call.1} parent=11 // pred_check
          %p451 = pneg %p74
        $region14: #{tpu_custom_call.1} parent=11 // pred_check_branch
          %453 = sbr.rel (%p451) target = $region16
        $region15: #{tpu_custom_call.1} parent=11 // pred_region
          _
        $region16: #{tpu_custom_call.1} parent=11 // pred_fallthru
          _
        // Predicated region
        $region17: #{tpu_custom_call.1} parent=11 // pred_check
          %p454 = pneg %p95
        $region18: #{tpu_custom_call.1} parent=11 // pred_check_branch
          %456 = sbr.rel (%p454) target = $region20
        $region19: #{tpu_custom_call.1} parent=11 // pred_region
          _
        $region20: #{tpu_custom_call.1} parent=11 // pred_fallthru
          _
        // Predicated region
        $region21: #{tpu_custom_call.1} parent=11 // pred_check
          %p457 = pneg %p116
        $region22: #{tpu_custom_call.1} parent=11 // pred_check_branch
          %459 = sbr.rel (%p457) target = $region24
        $region23: #{tpu_custom_call.1} parent=11 // pred_region
          _
        $region24: #{tpu_custom_call.1} parent=11 // pred_fallthru
          _
        // Predicated region
        $region25: #{tpu_custom_call.1} parent=11 // pred_check
          %p460 = pneg %p137
        $region26: #{tpu_custom_call.1} parent=11 // pred_check_branch
          %462 = sbr.rel (%p460) target = $region28
        $region27: #{tpu_custom_call.1} parent=11 // pred_region
          _
        $region28: #{tpu_custom_call.1} parent=11 // pred_fallthru
          _
        // Predicated region
        $region29: #{tpu_custom_call.1} parent=11 // pred_check
          %p463 = pneg %p158
        $region30: #{tpu_custom_call.1} parent=11 // pred_check_branch
          %465 = sbr.rel (%p463) target = $region32
        $region31: #{tpu_custom_call.1} parent=11 // pred_region
          _
        $region32: #{tpu_custom_call.1} parent=11 // pred_fallthru
          _
        // Predicated region
        $region33: #{tpu_custom_call.1} parent=11 // pred_check
          %p466 = pneg %p179
        $region34: #{tpu_custom_call.1} parent=11 // pred_check_branch
          %468 = sbr.rel (%p466) target = $region36
        $region35: #{tpu_custom_call.1} parent=11 // pred_region
          _
        $region36: #{tpu_custom_call.1} parent=11 // pred_fallthru
          _
        // Predicated region
        $region37: #{tpu_custom_call.1} parent=11 // pred_check
          %p469 = pneg %p200
        $region38: #{tpu_custom_call.1} parent=11 // pred_check_branch
          %471 = sbr.rel (%p469) target = $region40
        $region39: #{tpu_custom_call.1} parent=11 // pred_region
          _
        $region40: #{tpu_custom_call.1} parent=11 // pred_fallthru
          _
        // Predicated region
        $region41: #{tpu_custom_call.1} parent=11 // pred_check
          %p472 = pneg %p221
        $region42: #{tpu_custom_call.1} parent=11 // pred_check_branch
          %474 = sbr.rel (%p472) target = $region44
        $region43: #{tpu_custom_call.1} parent=11 // pred_region
          _
        $region44: #{tpu_custom_call.1} parent=11 // pred_fallthru
          _
        // Predicated region
        $region45: #{tpu_custom_call.1} parent=11 // pred_check
          %p475 = pneg %p242
        $region46: #{tpu_custom_call.1} parent=11 // pred_check_branch
          %477 = sbr.rel (%p475) target = $region48
        $region47: #{tpu_custom_call.1} parent=11 // pred_region
          _
        $region48: #{tpu_custom_call.1} parent=11 // pred_fallthru
          _
        // Predicated region
        $region49: #{tpu_custom_call.1} parent=11 // pred_check
          %p478 = pneg %p263
        $region50: #{tpu_custom_call.1} parent=11 // pred_check_branch
          %480 = sbr.rel (%p478) target = $region52
        $region51: #{tpu_custom_call.1} parent=11 // pred_region
          _
        $region52: #{tpu_custom_call.1} parent=11 // pred_fallthru
          _
        // Predicated region
        $region53: #{tpu_custom_call.1} parent=11 // pred_check
          %p481 = pneg %p284
        $region54: #{tpu_custom_call.1} parent=11 // pred_check_branch
          %483 = sbr.rel (%p481) target = $region56
        $region55: #{tpu_custom_call.1} parent=11 // pred_region
          _
        $region56: #{tpu_custom_call.1} parent=11 // pred_fallthru
          _
        // Predicated region
        $region57: #{tpu_custom_call.1} parent=11 // pred_check
          %p484 = pneg %p305
        $region58: #{tpu_custom_call.1} parent=11 // pred_check_branch
          %486 = sbr.rel (%p484) target = $region60
        $region59: #{tpu_custom_call.1} parent=11 // pred_region
          _
        $region60: #{tpu_custom_call.1} parent=11 // pred_fallthru
          _
        // Predicated region
        $region61: #{tpu_custom_call.1} parent=11 // pred_check
          %p487 = pneg %p326
        $region62: #{tpu_custom_call.1} parent=11 // pred_check_branch
          %489 = sbr.rel (%p487) target = $region64
        $region63: #{tpu_custom_call.1} parent=11 // pred_region
          _
        $region64: #{tpu_custom_call.1} parent=11 // pred_fallthru
          _
        // Predicated region
        $region65: #{tpu_custom_call.1} parent=11 // pred_check
          %p490 = pneg %p347
        $region66: #{tpu_custom_call.1} parent=11 // pred_check_branch
          %492 = sbr.rel (%p490) target = $region68
        $region67: #{tpu_custom_call.1} parent=11 // pred_region
          _
        $region68: #{tpu_custom_call.1} parent=11 // pred_fallthru
          _
        // Predicated region
        $region69: #{tpu_custom_call.1} parent=11 // pred_check
          %p493 = pneg %p368
        $region70: #{tpu_custom_call.1} parent=11 // pred_check_branch
          %495 = sbr.rel (%p493) target = $region72
        $region71: #{tpu_custom_call.1} parent=11 // pred_region
          _
        $region72: #{tpu_custom_call.1} parent=11 // pred_fallthru
          _
        // Predicated region
        $region73: #{tpu_custom_call.1} parent=11 // pred_check
          %p496 = pneg %p389
        $region74: #{tpu_custom_call.1} parent=11 // pred_check_branch
          %498 = sbr.rel (%p496) target = $region76
        $region75: #{tpu_custom_call.1} parent=11 // pred_region
          _
        $region76: #{tpu_custom_call.1} parent=11 // pred_fallthru
          _
        // Predicated region
        $region77: #{tpu_custom_call.1} parent=11 // pred_check
          %p499 = pneg %p410
        $region78: #{tpu_custom_call.1} parent=11 // pred_check_branch
          %501 = sbr.rel (%p499) target = $region80
        $region79: #{tpu_custom_call.1} parent=11 // pred_region
          _
        $region80: #{tpu_custom_call.1} parent=11 // pred_fallthru
          _
      $region12: #{tpu_custom_call.1} parent=5 // pred_fallthru
        _
      %p502 = scmp.lt.s32.totalorder %s27, 2
      // Predicated region
      $region81: #{tpu_custom_call.1} parent=5 // pred_check
        %p503 = pneg %p502
      $region82: #{tpu_custom_call.1} parent=5 // pred_check_branch
        %505 = sbr.rel (%p503) target = $region84
      $region83: #{tpu_custom_call.1} parent=5 // pred_region
        // Predicated region
        $region85: #{tpu_custom_call.1} parent=83 // pred_check
          %p506 = pneg %p47
        $region86: #{tpu_custom_call.1} parent=83 // pred_check_branch
          %508 = sbr.rel (%p506) target = $region88
        $region87: #{tpu_custom_call.1} parent=83 // pred_region
          %p509 = scmp.lt.s32.totalorder %s27, 1
          %s510 = scalar_select %p509, %s27, 1
          %s511 = smul.addr %s510, 2
          %s512 = smul.addr %s511, 4
          %s513 = scalar_lea.vmem %s0, %s512
        $region88: #{tpu_custom_call.1} parent=83 // pred_fallthru
          _
      $region84: #{tpu_custom_call.1} parent=5 // pred_fallthru
        _
      %p514 = scmp.le.s32.totalorder 1, %s27
      %p515 = scmp.lt.s32.totalorder %s27, 3
      %p516 = pnand %p514, %p515
      %p517 = pneg %p516
      // Predicated region
      $region89: #{tpu_custom_call.1} parent=5 // pred_check
        _
      $region90: #{tpu_custom_call.1} parent=5 // pred_check_branch
        %519 = sbr.rel (%p516) target = $region92
      $region91: #{tpu_custom_call.1} parent=5 // pred_region
        %s520 = ssub.s32 %s27, 1
        %p521 = scmp.lt.s32.totalorder %s32, 1
        %s522 = scalar_select %p521, %s32, 1
        %s523 = smul.addr %s522, 2
        %s524 = smul.addr %s523, 4
        %s525 = scalar_lea.vmem %s0, %s524
        %p526 = pneg %p53
        %p527 = pneg %p50
        %p528 = pneg %p74
        %p529 = pneg %p71
        %p530 = pneg %p95
        %p531 = pneg %p92
        %p532 = pneg %p116
        %p533 = pneg %p113
        %p534 = pneg %p137
        %p535 = pneg %p134
        %p536 = pneg %p158
        %p537 = pneg %p155
        %p538 = pneg %p179
        %p539 = pneg %p176
        %p540 = pneg %p200
        %p541 = pneg %p197
        %p542 = pneg %p221
        %p543 = pneg %p218
        %p544 = pneg %p242
        %p545 = pneg %p239
        %p546 = pneg %p263
        %p547 = pneg %p260
        %p548 = pneg %p284
        %p549 = pneg %p281
        %p550 = pneg %p305
        %p551 = pneg %p302
        %p552 = pneg %p326
        %p553 = pneg %p323
        %p554 = pneg %p347
        %p555 = pneg %p344
        %p556 = pneg %p368
        %p557 = pneg %p365
        %p558 = pneg %p389
        %p559 = pneg %p386
        %p560 = pneg %p410
        %p561 = pneg %p407
        %p562 = pneg %p436
        %p563 = pneg %p433
        %s564 = sand.u32 %s423, 1
        %s565 = scalar_lea.sflag [#allocation3], %s564
        %s566 = sand.u32 %s423, 1
        %s567 = smul.addr %s566, 16
        %s568 = scalar_lea.vmem [#allocation2], %s567
        %p569 = scmp.lt.s32.totalorder %s32, 1
        %s570 = scalar_select %p569, %s32, 1
        %s571 = smul.addr %s570, 2
        %s572 = smul.addr %s571, 4
        %s573 = scalar_lea.vmem %s0, %s572
        %v574 = vld [vmem:[%s573] sm:$0xff]
        %v575 = vld [vmem:[%s1] sm:$0xff]
        %v576 = vld [vmem:[%s1 + $0x8] sm:$0xff]
        %v577 = vld [vmem:[%s1 + $0x10] sm:$0x1]
        %v578 = vld [vmem:[%s1 + $0x18] sm:$0x1]
        %v579 = vld [vmem:[%s2] sm:$0xf]
        %v580 = vld [vmem:[%s3] sm:$0xf]
        %582 = vset.pattern.permute.xlu0 0
        %583 = vperm.xlu0 %582, %v579
        %v584 = vpop.permute.xlu0 %583
        %v587 = vlaneseq
        %v588 = vshrl.u32 %v587, 7
        %v589 = vsub.s32 0, %v588
        %v590 = vrot.slane %v574, %v589
        %v591 = vlaneseq
        %v592 = vshrl.u32 %v591, 7
        %v593 = vsub.s32 4, %v592
        %v594 = vrot.slane %v574, %v593
        %v597 = vlaneseq
        %v598 = vshrl.u32 %v597, 7
        %v599 = vsub.s32 0, %v598
        %v600 = vrot.slane %v590, %v599
        %v601 = vlaneseq
        %v602 = vshrl.u32 %v601, 7
        %v603 = vsub.s32 0, %v602
        %v604 = vrot.slane %v594, %v603
        %v605 = vmul.f32 %v584, %v600
        %v606 = vmul.f32 %v584, %v604
        %v607 = vadd.f32 %v605, 0.0
        %v608 = vadd.f32 %v606, 0.0
        %609 = vset.pattern.permute.xlu0 1
        %610 = vperm.xlu0 %609, %v579
        %v611 = vpop.permute.xlu0 %610
        %v613 = vlaneseq
        %v614 = vshrl.u32 %v613, 7
        %v615 = vsub.s32 1, %v614
        %v616 = vrot.slane %v574, %v615
        %v617 = vlaneseq
        %v618 = vshrl.u32 %v617, 7
        %v619 = vsub.s32 5, %v618
        %v620 = vrot.slane %v574, %v619
        %v623 = vlaneseq
        %v624 = vshrl.u32 %v623, 7
        %v625 = vsub.s32 1, %v624
        %v626 = vrot.slane %v616, %v625
        %v627 = vlaneseq
        %v628 = vshrl.u32 %v627, 7
        %v629 = vsub.s32 1, %v628
        %v630 = vrot.slane %v620, %v629
        %v631 = vmul.f32 %v611, %v626
        %v632 = vmul.f32 %v611, %v630
        %v633 = vadd.f32 %v607, %v631
        %v634 = vadd.f32 %v608, %v632
        %635 = vset.pattern.permute.xlu0 2
        %636 = vperm.xlu0 %635, %v579
        %v637 = vpop.permute.xlu0 %636
        %v639 = vlaneseq
        %v640 = vshrl.u32 %v639, 7
        %v641 = vsub.s32 2, %v640
        %v642 = vrot.slane %v574, %v641
        %v643 = vlaneseq
        %v644 = vshrl.u32 %v643, 7
        %v645 = vsub.s32 6, %v644
        %v646 = vrot.slane %v574, %v645
        %v649 = vlaneseq
        %v650 = vshrl.u32 %v649, 7
        %v651 = vsub.s32 2, %v650
        %v652 = vrot.slane %v642, %v651
        %v653 = vlaneseq
        %v654 = vshrl.u32 %v653, 7
        %v655 = vsub.s32 2, %v654
        %v656 = vrot.slane %v646, %v655
        %v657 = vmul.f32 %v637, %v652
        %v658 = vmul.f32 %v637, %v656
        %v659 = vadd.f32 %v633, %v657
        %v660 = vadd.f32 %v634, %v658
        %661 = vset.pattern.permute.xlu0 3
        %662 = vperm.xlu0 %661, %v579
        %v663 = vpop.permute.xlu0 %662
        %v665 = vlaneseq
        %v666 = vshrl.u32 %v665, 7
        %v667 = vsub.s32 3, %v666
        %v668 = vrot.slane %v574, %v667
        %v669 = vlaneseq
        %v670 = vshrl.u32 %v669, 7
        %v671 = vsub.s32 7, %v670
        %v672 = vrot.slane %v574, %v671
        %v675 = vlaneseq
        %v676 = vshrl.u32 %v675, 7
        %v677 = vsub.s32 3, %v676
        %v678 = vrot.slane %v668, %v677
        %v679 = vlaneseq
        %v680 = vshrl.u32 %v679, 7
        %v681 = vsub.s32 3, %v680
        %v682 = vrot.slane %v672, %v681
        %v683 = vmul.f32 %v663, %v678
        %v684 = vmul.f32 %v663, %v682
        %v685 = vadd.f32 %v659, %v683
        %v686 = vadd.f32 %v660, %v684
        %688 = vset.pattern.permute.xlu0 0
        %689 = vperm.xlu0 %688, %v580
        %v690 = vpop.permute.xlu0 %689
        %v692 = vadd.f32 %v685, %v690
        %v693 = vadd.f32 %v686, %v690
        %v694 = vmax.f32 %v692, 0.0
        %v695 = vmax.f32 %v693, 0.0
        %v696 = vld [vmem:[%s4] sm:$0xf]
        %v697 = vld [vmem:[%s5] sm:$0xf]
        %698 = vrot.lane.b32.xlu0 %v694, 17
        %v699 = vpop.permute.xlu0 %698
        %700 = vrot.lane.b32.xlu0 %v695, 17
        %v701 = vpop.permute.xlu0 %700
        %v702 = vlaneseq
        %v703 = vand.u32 %v702, 127
        %vm704 = vcmp.lt.s32.totalorder %v703, 17
        %v705 = vsel %vm704, %v699, %v701
        %v706 = vsel %vm704, %v701, %v699
        %v707 = vlaneseq
        %v708 = vshrl.u32 %v707, 7
        %v709 = vsub.s32 0, %v708
        %v710 = vrot.slane %v575, %v709
        %v711 = vlaneseq
        %v712 = vshrl.u32 %v711, 7
        %v713 = vsub.s32 0, %v712
        %v714 = vrot.slane %v576, %v713
        %v715 = vmul.f32 %v706, %v710
        %v716 = vmul.f32 %v705, %v714
        %718 = vset.pattern.permute.xlu0 0
        %719 = vperm.xlu0 %718, %v696
        %v720 = vpop.permute.xlu0 %719
        %v722 = vmul.f32 %v720, %v715
        %v723 = vmul.f32 %v720, %v716
        %v724 = vadd.f32 %v722, 0.0
        %v725 = vadd.f32 %v723, 0.0
        %726 = vrot.lane.b32.xlu0 %v694, 16
        %v727 = vpop.permute.xlu0 %726
        %728 = vrot.lane.b32.xlu0 %v695, 16
        %v729 = vpop.permute.xlu0 %728
        %vm730 = vcmp.lt.s32.totalorder %v703, 16
        %v731 = vsel %vm730, %v727, %v729
        %v732 = vsel %vm730, %v729, %v727
        %v733 = vlaneseq
        %v734 = vshrl.u32 %v733, 7
        %v735 = vsub.s32 1, %v734
        %v736 = vrot.slane %v575, %v735
        %v737 = vlaneseq
        %v738 = vshrl.u32 %v737, 7
        %v739 = vsub.s32 1, %v738
        %v740 = vrot.slane %v576, %v739
        %v741 = vmul.f32 %v732, %v736
        %v742 = vmul.f32 %v731, %v740
        %743 = vset.pattern.permute.xlu0 1
        %744 = vperm.xlu0 %743, %v696
        %v745 = vpop.permute.xlu0 %744
        %v747 = vmul.f32 %v745, %v741
        %v748 = vmul.f32 %v745, %v742
        %v749 = vadd.f32 %v724, %v747
        %v750 = vadd.f32 %v725, %v748
        %751 = vrot.lane.b32.xlu0 %v694, 15
        %v752 = vpop.permute.xlu0 %751
        %753 = vrot.lane.b32.xlu0 %v695, 15
        %v754 = vpop.permute.xlu0 %753
        %vm755 = vcmp.lt.s32.totalorder %v703, 15
        %v756 = vsel %vm755, %v752, %v754
        %v757 = vsel %vm755, %v754, %v752
        %v758 = vlaneseq
        %v759 = vshrl.u32 %v758, 7
        %v760 = vsub.s32 2, %v759
        %v761 = vrot.slane %v575, %v760
        %v762 = vlaneseq
        %v763 = vshrl.u32 %v762, 7
        %v764 = vsub.s32 2, %v763
        %v765 = vrot.slane %v576, %v764
        %v766 = vmul.f32 %v757, %v761
        %v767 = vmul.f32 %v756, %v765
        %768 = vset.pattern.permute.xlu0 2
        %769 = vperm.xlu0 %768, %v696
        %v770 = vpop.permute.xlu0 %769
        %v772 = vmul.f32 %v770, %v766
        %v773 = vmul.f32 %v770, %v767
        %v774 = vadd.f32 %v749, %v772
        %v775 = vadd.f32 %v750, %v773
        %776 = vrot.lane.b32.xlu0 %v694, 1
        %v777 = vpop.permute.xlu0 %776
        %778 = vrot.lane.b32.xlu0 %v695, 1
        %v779 = vpop.permute.xlu0 %778
        %vm780 = vcmp.lt.s32.totalorder %v703, 1
        %v781 = vsel %vm780, %v777, %v779
        %v782 = vsel %vm780, %v779, %v777
        %v783 = vlaneseq
        %v784 = vshrl.u32 %v783, 7
        %v785 = vsub.s32 3, %v784
        %v786 = vrot.slane %v575, %v785
        %v787 = vlaneseq
        %v788 = vshrl.u32 %v787, 7
        %v789 = vsub.s32 3, %v788
        %v790 = vrot.slane %v576, %v789
        %v791 = vmul.f32 %v782, %v786
        %v792 = vmul.f32 %v781, %v790
        %793 = vset.pattern.permute.xlu0 3
        %794 = vperm.xlu0 %793, %v696
        %v795 = vpop.permute.xlu0 %794
        %v797 = vmul.f32 %v795, %v791
        %v798 = vmul.f32 %v795, %v792
        %v799 = vadd.f32 %v774, %v797
        %v800 = vadd.f32 %v775, %v798
        %801 = vset.pattern.permute.xlu0 4
        %802 = vperm.xlu0 %801, %v696
        %v803 = vpop.permute.xlu0 %802
        %v805 = vmul.f32 %v803, %v694
        %v806 = vmul.f32 %v803, %v695
        %v807 = vadd.f32 %v799, %v805
        %v808 = vadd.f32 %v800, %v806
        %809 = vrot.lane.b32.xlu0 %v694, 127
        %v810 = vpop.permute.xlu0 %809
        %811 = vrot.lane.b32.xlu0 %v695, 127
        %v812 = vpop.permute.xlu0 %811
        %vm813 = vcmp.lt.s32.totalorder %v703, 127
        %v814 = vsel %vm813, %v810, %v812
        %v815 = vsel %vm813, %v812, %v810
        %v816 = vlaneseq
        %v817 = vshrl.u32 %v816, 7
        %v818 = vsub.s32 5, %v817
        %v819 = vrot.slane %v575, %v818
        %v820 = vlaneseq
        %v821 = vshrl.u32 %v820, 7
        %v822 = vsub.s32 5, %v821
        %v823 = vrot.slane %v576, %v822
        %v824 = vmul.f32 %v814, %v819
        %v825 = vmul.f32 %v815, %v823
        %826 = vset.pattern.permute.xlu0 5
        %827 = vperm.xlu0 %826, %v696
        %v828 = vpop.permute.xlu0 %827
        %v830 = vmul.f32 %v828, %v824
        %v831 = vmul.f32 %v828, %v825
        %v832 = vadd.f32 %v807, %v830
        %v833 = vadd.f32 %v808, %v831
        %834 = vrot.lane.b32.xlu0 %v694, 113
        %v835 = vpop.permute.xlu0 %834
        %836 = vrot.lane.b32.xlu0 %v695, 113
        %v837 = vpop.permute.xlu0 %836
        %vm838 = vcmp.lt.s32.totalorder %v703, 113
        %v839 = vsel %vm838, %v835, %v837
        %v840 = vsel %vm838, %v837, %v835
        %v841 = vlaneseq
        %v842 = vshrl.u32 %v841, 7
        %v843 = vsub.s32 6, %v842
        %v844 = vrot.slane %v575, %v843
        %v845 = vlaneseq
        %v846 = vshrl.u32 %v845, 7
        %v847 = vsub.s32 6, %v846
        %v848 = vrot.slane %v576, %v847
        %v849 = vmul.f32 %v839, %v844
        %v850 = vmul.f32 %v840, %v848
        %851 = vset.pattern.permute.xlu0 6
        %852 = vperm.xlu0 %851, %v696
        %v853 = vpop.permute.xlu0 %852
        %v855 = vmul.f32 %v853, %v849
        %v856 = vmul.f32 %v853, %v850
        %v857 = vadd.f32 %v832, %v855
        %v858 = vadd.f32 %v833, %v856
        %859 = vrot.lane.b32.xlu0 %v694, 112
        %v860 = vpop.permute.xlu0 %859
        %861 = vrot.lane.b32.xlu0 %v695, 112
        %v862 = vpop.permute.xlu0 %861
        %vm863 = vcmp.lt.s32.totalorder %v703, 112
        %v864 = vsel %vm863, %v860, %v862
        %v865 = vsel %vm863, %v862, %v860
        %v866 = vlaneseq
        %v867 = vshrl.u32 %v866, 7
        %v868 = vsub.s32 7, %v867
        %v869 = vrot.slane %v575, %v868
        %v870 = vlaneseq
        %v871 = vshrl.u32 %v870, 7
        %v872 = vsub.s32 7, %v871
        %v873 = vrot.slane %v576, %v872
        %v874 = vmul.f32 %v864, %v869
        %v875 = vmul.f32 %v865, %v873
        %876 = vset.pattern.permute.xlu0 7
        %877 = vperm.xlu0 %876, %v696
        %v878 = vpop.permute.xlu0 %877
        %v880 = vmul.f32 %v878, %v874
        %v881 = vmul.f32 %v878, %v875
        %v882 = vadd.f32 %v857, %v880
        %v883 = vadd.f32 %v858, %v881
        %884 = vrot.lane.b32.xlu0 %v694, 111
        %v885 = vpop.permute.xlu0 %884
        %886 = vrot.lane.b32.xlu0 %v695, 111
        %v887 = vpop.permute.xlu0 %886
        %vm888 = vcmp.lt.s32.totalorder %v703, 111
        %v889 = vsel %vm888, %v885, %v887
        %v890 = vsel %vm888, %v887, %v885
        %v891 = vlaneseq
        %v892 = vshrl.u32 %v891, 7
        %v893 = vsub.s32 0, %v892
        %v894 = vrot.slane %v577, %v893
        %v895 = vlaneseq
        %v896 = vshrl.u32 %v895, 7
        %v897 = vsub.s32 0, %v896
        %v898 = vrot.slane %v578, %v897
        %v899 = vmul.f32 %v889, %v894
        %v900 = vmul.f32 %v890, %v898
        %901 = vset.pattern.permute.xlu0 8
        %902 = vperm.xlu0 %901, %v696
        %v903 = vpop.permute.xlu0 %902
        %v905 = vmul.f32 %v903, %v899
        %v906 = vmul.f32 %v903, %v900
        %v907 = vadd.f32 %v882, %v905
        %v908 = vadd.f32 %v883, %v906
        %910 = vset.pattern.permute.xlu0 0
        %911 = vperm.xlu0 %910, %v697
        %v912 = vpop.permute.xlu0 %911
        %v914 = vadd.f32 %v907, %v912
        %v915 = vadd.f32 %v908, %v912
        %v916 = vmax.f32 %v914, 0.0
        %v917 = vmax.f32 %v915, 0.0
        %v918 = vld [vmem:[%s6] sm:$0xff]
        %v919 = vld [vmem:[%s7] sm:$0xff]
        %921 = vset.pattern.permute.xlu0 0
        %922 = vperm.xlu0 %921, %v918
        %v923 = vpop.permute.xlu0 %922
        %v925 = vlaneseq
        %v926 = vshrl.u32 %v925, 7
        %v927 = vsub.s32 0, %v926
        %v928 = vrot.slane %v916, %v927
        %v929 = vlaneseq
        %v930 = vshrl.u32 %v929, 7
        %v931 = vsub.s32 0, %v930
        %v932 = vrot.slane %v917, %v931
        %v933 = vmul.f32 %v923, %v928
        %v934 = vmul.f32 %v923, %v932
        %v935 = vadd.f32 %v933, 0.0
        %v936 = vadd.f32 %v934, 0.0
        %937 = vset.pattern.permute.xlu0 1
        %938 = vperm.xlu0 %937, %v918
        %v939 = vpop.permute.xlu0 %938
        %v941 = vlaneseq
        %v942 = vshrl.u32 %v941, 7
        %v943 = vsub.s32 1, %v942
        %v944 = vrot.slane %v916, %v943
        %v945 = vlaneseq
        %v946 = vshrl.u32 %v945, 7
        %v947 = vsub.s32 1, %v946
        %v948 = vrot.slane %v917, %v947
        %v949 = vmul.f32 %v939, %v944
        %v950 = vmul.f32 %v939, %v948
        %v951 = vadd.f32 %v935, %v949
        %v952 = vadd.f32 %v936, %v950
        %953 = vset.pattern.permute.xlu0 2
        %954 = vperm.xlu0 %953, %v918
        %v955 = vpop.permute.xlu0 %954
        %v957 = vlaneseq
        %v958 = vshrl.u32 %v957, 7
        %v959 = vsub.s32 2, %v958
        %v960 = vrot.slane %v916, %v959
        %v961 = vlaneseq
        %v962 = vshrl.u32 %v961, 7
        %v963 = vsub.s32 2, %v962
        %v964 = vrot.slane %v917, %v963
        %v965 = vmul.f32 %v955, %v960
        %v966 = vmul.f32 %v955, %v964
        %v967 = vadd.f32 %v951, %v965
        %v968 = vadd.f32 %v952, %v966
        %969 = vset.pattern.permute.xlu0 3
        %970 = vperm.xlu0 %969, %v918
        %v971 = vpop.permute.xlu0 %970
        %v973 = vlaneseq
        %v974 = vshrl.u32 %v973, 7
        %v975 = vsub.s32 3, %v974
        %v976 = vrot.slane %v916, %v975
        %v977 = vlaneseq
        %v978 = vshrl.u32 %v977, 7
        %v979 = vsub.s32 3, %v978
        %v980 = vrot.slane %v917, %v979
        %v981 = vmul.f32 %v971, %v976
        %v982 = vmul.f32 %v971, %v980
        %v983 = vadd.f32 %v967, %v981
        %v984 = vadd.f32 %v968, %v982
        %986 = vset.pattern.permute.xlu0 0
        %987 = vperm.xlu0 %986, %v919
        %v988 = vpop.permute.xlu0 %987
        %v990 = vadd.f32 %v983, %v988
        %v991 = vadd.f32 %v984, %v988
        %v992 = vld [vmem:[%s8] sm:$0xff]
        %v993 = vld [vmem:[%s9] sm:$0xff]
        %995 = vset.pattern.permute.xlu0 0
        %996 = vperm.xlu0 %995, %v992
        %v997 = vpop.permute.xlu0 %996
        %v999 = vlaneseq
        %v1000 = vshrl.u32 %v999, 7
        %v1001 = vsub.s32 0, %v1000
        %v1002 = vrot.slane %v990, %v1001
        %v1003 = vlaneseq
        %v1004 = vshrl.u32 %v1003, 7
        %v1005 = vsub.s32 0, %v1004
        %v1006 = vrot.slane %v991, %v1005
        %v1007 = vmul.f32 %v997, %v1002
        %v1008 = vmul.f32 %v997, %v1006
        %v1009 = vadd.f32 %v1007, 0.0
        %v1010 = vadd.f32 %v1008, 0.0
        %1011 = vset.pattern.permute.xlu0 1
        %1012 = vperm.xlu0 %1011, %v992
        %v1013 = vpop.permute.xlu0 %1012
        %v1015 = vlaneseq
        %v1016 = vshrl.u32 %v1015, 7
        %v1017 = vsub.s32 1, %v1016
        %v1018 = vrot.slane %v990, %v1017
        %v1019 = vlaneseq
        %v1020 = vshrl.u32 %v1019, 7
        %v1021 = vsub.s32 1, %v1020
        %v1022 = vrot.slane %v991, %v1021
        %v1023 = vmul.f32 %v1013, %v1018
        %v1024 = vmul.f32 %v1013, %v1022
        %v1025 = vadd.f32 %v1009, %v1023
        %v1026 = vadd.f32 %v1010, %v1024
        %1027 = vset.pattern.permute.xlu0 2
        %1028 = vperm.xlu0 %1027, %v992
        %v1029 = vpop.permute.xlu0 %1028
        %v1031 = vlaneseq
        %v1032 = vshrl.u32 %v1031, 7
        %v1033 = vsub.s32 2, %v1032
        %v1034 = vrot.slane %v990, %v1033
        %v1035 = vlaneseq
        %v1036 = vshrl.u32 %v1035, 7
        %v1037 = vsub.s32 2, %v1036
        %v1038 = vrot.slane %v991, %v1037
        %v1039 = vmul.f32 %v1029, %v1034
        %v1040 = vmul.f32 %v1029, %v1038
        %v1041 = vadd.f32 %v1025, %v1039
        %v1042 = vadd.f32 %v1026, %v1040
        %1043 = vset.pattern.permute.xlu0 3
        %1044 = vperm.xlu0 %1043, %v992
        %v1045 = vpop.permute.xlu0 %1044
        %v1047 = vlaneseq
        %v1048 = vshrl.u32 %v1047, 7
        %v1049 = vsub.s32 3, %v1048
        %v1050 = vrot.slane %v990, %v1049
        %v1051 = vlaneseq
        %v1052 = vshrl.u32 %v1051, 7
        %v1053 = vsub.s32 3, %v1052
        %v1054 = vrot.slane %v991, %v1053
        %v1055 = vmul.f32 %v1045, %v1050
        %v1056 = vmul.f32 %v1045, %v1054
        %v1057 = vadd.f32 %v1041, %v1055
        %v1058 = vadd.f32 %v1042, %v1056
        %1059 = vset.pattern.permute.xlu0 4
        %1060 = vperm.xlu0 %1059, %v992
        %v1061 = vpop.permute.xlu0 %1060
        %v1063 = vlaneseq
        %v1064 = vshrl.u32 %v1063, 7
        %v1065 = vsub.s32 4, %v1064
        %v1066 = vrot.slane %v990, %v1065
        %v1067 = vlaneseq
        %v1068 = vshrl.u32 %v1067, 7
        %v1069 = vsub.s32 4, %v1068
        %v1070 = vrot.slane %v991, %v1069
        %v1071 = vmul.f32 %v1061, %v1066
        %v1072 = vmul.f32 %v1061, %v1070
        %v1073 = vadd.f32 %v1057, %v1071
        %v1074 = vadd.f32 %v1058, %v1072
        %1075 = vset.pattern.permute.xlu0 5
        %1076 = vperm.xlu0 %1075, %v992
        %v1077 = vpop.permute.xlu0 %1076
        %v1079 = vlaneseq
        %v1080 = vshrl.u32 %v1079, 7
        %v1081 = vsub.s32 5, %v1080
        %v1082 = vrot.slane %v990, %v1081
        %v1083 = vlaneseq
        %v1084 = vshrl.u32 %v1083, 7
        %v1085 = vsub.s32 5, %v1084
        %v1086 = vrot.slane %v991, %v1085
        %v1087 = vmul.f32 %v1077, %v1082
        %v1088 = vmul.f32 %v1077, %v1086
        %v1089 = vadd.f32 %v1073, %v1087
        %v1090 = vadd.f32 %v1074, %v1088
        %1091 = vset.pattern.permute.xlu0 6
        %1092 = vperm.xlu0 %1091, %v992
        %v1093 = vpop.permute.xlu0 %1092
        %v1095 = vlaneseq
        %v1096 = vshrl.u32 %v1095, 7
        %v1097 = vsub.s32 6, %v1096
        %v1098 = vrot.slane %v990, %v1097
        %v1099 = vlaneseq
        %v1100 = vshrl.u32 %v1099, 7
        %v1101 = vsub.s32 6, %v1100
        %v1102 = vrot.slane %v991, %v1101
        %v1103 = vmul.f32 %v1093, %v1098
        %v1104 = vmul.f32 %v1093, %v1102
        %v1105 = vadd.f32 %v1089, %v1103
        %v1106 = vadd.f32 %v1090, %v1104
        %1107 = vset.pattern.permute.xlu0 7
        %1108 = vperm.xlu0 %1107, %v992
        %v1109 = vpop.permute.xlu0 %1108
        %v1111 = vlaneseq
        %v1112 = vshrl.u32 %v1111, 7
        %v1113 = vsub.s32 7, %v1112
        %v1114 = vrot.slane %v990, %v1113
        %v1115 = vlaneseq
        %v1116 = vshrl.u32 %v1115, 7
        %v1117 = vsub.s32 7, %v1116
        %v1118 = vrot.slane %v991, %v1117
        %v1119 = vmul.f32 %v1109, %v1114
        %v1120 = vmul.f32 %v1109, %v1118
        %v1121 = vadd.f32 %v1105, %v1119
        %v1122 = vadd.f32 %v1106, %v1120
        %1124 = vset.pattern.permute.xlu0 0
        %1125 = vperm.xlu0 %1124, %v993
        %v1126 = vpop.permute.xlu0 %1125
        %v1128 = vadd.f32 %v1121, %v1126
        %v1129 = vadd.f32 %v1122, %v1126
        %v1130 = vmax.f32 %v1128, 0.0
        %v1131 = vmax.f32 %v1129, 0.0
        %v1132 = vld [vmem:[%s10] sm:$0xff]
        %v1133 = vld [vmem:[%s11] sm:$0xff]
        %1134 = vrot.lane.b32.xlu0 %v1130, 17
        %v1135 = vpop.permute.xlu0 %1134
        %1136 = vrot.lane.b32.xlu0 %v1131, 17
        %v1137 = vpop.permute.xlu0 %1136
        %v1138 = vsel %vm704, %v1135, %v1137
        %v1139 = vsel %vm704, %v1137, %v1135
        %v1140 = vmul.f32 %v1139, %v710
        %v1141 = vmul.f32 %v1138, %v714
        %1143 = vset.pattern.permute.xlu0 0
        %1144 = vperm.xlu0 %1143, %v1132
        %v1145 = vpop.permute.xlu0 %1144
        %v1147 = vmul.f32 %v1145, %v1140
        %v1148 = vmul.f32 %v1145, %v1141
        %v1149 = vadd.f32 %v1147, 0.0
        %v1150 = vadd.f32 %v1148, 0.0
        %1151 = vrot.lane.b32.xlu0 %v1130, 16
        %v1152 = vpop.permute.xlu0 %1151
        %1153 = vrot.lane.b32.xlu0 %v1131, 16
        %v1154 = vpop.permute.xlu0 %1153
        %v1155 = vsel %vm730, %v1152, %v1154
        %v1156 = vsel %vm730, %v1154, %v1152
        %v1157 = vmul.f32 %v1156, %v736
        %v1158 = vmul.f32 %v1155, %v740
        %1159 = vset.pattern.permute.xlu0 1
        %1160 = vperm.xlu0 %1159, %v1132
        %v1161 = vpop.permute.xlu0 %1160
        %v1163 = vmul.f32 %v1161, %v1157
        %v1164 = vmul.f32 %v1161, %v1158
        %v1165 = vadd.f32 %v1149, %v1163
        %v1166 = vadd.f32 %v1150, %v1164
        %1167 = vrot.lane.b32.xlu0 %v1130, 15
        %v1168 = vpop.permute.xlu0 %1167
        %1169 = vrot.lane.b32.xlu0 %v1131, 15
        %v1170 = vpop.permute.xlu0 %1169
        %v1171 = vsel %vm755, %v1168, %v1170
        %v1172 = vsel %vm755, %v1170, %v1168
        %v1173 = vmul.f32 %v1172, %v761
        %v1174 = vmul.f32 %v1171, %v765
        %1175 = vset.pattern.permute.xlu0 2
        %1176 = vperm.xlu0 %1175, %v1132
        %v1177 = vpop.permute.xlu0 %1176
        %v1179 = vmul.f32 %v1177, %v1173
        %v1180 = vmul.f32 %v1177, %v1174
        %v1181 = vadd.f32 %v1165, %v1179
        %v1182 = vadd.f32 %v1166, %v1180
        %1183 = vrot.lane.b32.xlu0 %v1130, 1
        %v1184 = vpop.permute.xlu0 %1183
        %1185 = vrot.lane.b32.xlu0 %v1131, 1
        %v1186 = vpop.permute.xlu0 %1185
        %v1187 = vsel %vm780, %v1184, %v1186
        %v1188 = vsel %vm780, %v1186, %v1184
        %v1189 = vmul.f32 %v1188, %v786
        %v1190 = vmul.f32 %v1187, %v790
        %1191 = vset.pattern.permute.xlu0 3
        %1192 = vperm.xlu0 %1191, %v1132
        %v1193 = vpop.permute.xlu0 %1192
        %v1195 = vmul.f32 %v1193, %v1189
        %v1196 = vmul.f32 %v1193, %v1190
        %v1197 = vadd.f32 %v1181, %v1195
        %v1198 = vadd.f32 %v1182, %v1196
        %1199 = vset.pattern.permute.xlu0 4
        %1200 = vperm.xlu0 %1199, %v1132
        %v1201 = vpop.permute.xlu0 %1200
        %v1203 = vmul.f32 %v1201, %v1130
        %v1204 = vmul.f32 %v1201, %v1131
        %v1205 = vadd.f32 %v1197, %v1203
        %v1206 = vadd.f32 %v1198, %v1204
        %1207 = vrot.lane.b32.xlu0 %v1130, 127
        %v1208 = vpop.permute.xlu0 %1207
        %1209 = vrot.lane.b32.xlu0 %v1131, 127
        %v1210 = vpop.permute.xlu0 %1209
        %v1211 = vsel %vm813, %v1208, %v1210
        %v1212 = vsel %vm813, %v1210, %v1208
        %v1213 = vmul.f32 %v1211, %v819
        %v1214 = vmul.f32 %v1212, %v823
        %1215 = vset.pattern.permute.xlu0 5
        %1216 = vperm.xlu0 %1215, %v1132
        %v1217 = vpop.permute.xlu0 %1216
        %v1219 = vmul.f32 %v1217, %v1213
        %v1220 = vmul.f32 %v1217, %v1214
        %v1221 = vadd.f32 %v1205, %v1219
        %v1222 = vadd.f32 %v1206, %v1220
        %1223 = vrot.lane.b32.xlu0 %v1130, 113
        %v1224 = vpop.permute.xlu0 %1223
        %1225 = vrot.lane.b32.xlu0 %v1131, 113
        %v1226 = vpop.permute.xlu0 %1225
        %v1227 = vsel %vm838, %v1224, %v1226
        %v1228 = vsel %vm838, %v1226, %v1224
        %v1229 = vmul.f32 %v1227, %v844
        %v1230 = vmul.f32 %v1228, %v848
        %1231 = vset.pattern.permute.xlu0 6
        %1232 = vperm.xlu0 %1231, %v1132
        %v1233 = vpop.permute.xlu0 %1232
        %v1235 = vmul.f32 %v1233, %v1229
        %v1236 = vmul.f32 %v1233, %v1230
        %v1237 = vadd.f32 %v1221, %v1235
        %v1238 = vadd.f32 %v1222, %v1236
        %1239 = vrot.lane.b32.xlu0 %v1130, 112
        %v1240 = vpop.permute.xlu0 %1239
        %1241 = vrot.lane.b32.xlu0 %v1131, 112
        %v1242 = vpop.permute.xlu0 %1241
        %v1243 = vsel %vm863, %v1240, %v1242
        %v1244 = vsel %vm863, %v1242, %v1240
        %v1245 = vmul.f32 %v1243, %v869
        %v1246 = vmul.f32 %v1244, %v873
        %1247 = vset.pattern.permute.xlu0 7
        %1248 = vperm.xlu0 %1247, %v1132
        %v1249 = vpop.permute.xlu0 %1248
        %v1251 = vmul.f32 %v1249, %v1245
        %v1252 = vmul.f32 %v1249, %v1246
        %v1253 = vadd.f32 %v1237, %v1251
        %v1254 = vadd.f32 %v1238, %v1252
        %1255 = vrot.lane.b32.xlu0 %v1130, 111
        %v1256 = vpop.permute.xlu0 %1255
        %1257 = vrot.lane.b32.xlu0 %v1131, 111
        %v1258 = vpop.permute.xlu0 %1257
        %v1259 = vsel %vm888, %v1256, %v1258
        %v1260 = vsel %vm888, %v1258, %v1256
        %v1261 = vmul.f32 %v1259, %v894
        %v1262 = vmul.f32 %v1260, %v898
        %1263 = vset.pattern.permute.xlu0 8
        %1264 = vperm.xlu0 %1263, %v1132
        %v1265 = vpop.permute.xlu0 %1264
        %v1267 = vmul.f32 %v1265, %v1261
        %v1268 = vmul.f32 %v1265, %v1262
        %v1269 = vadd.f32 %v1253, %v1267
        %v1270 = vadd.f32 %v1254, %v1268
        %1272 = vset.pattern.permute.xlu0 0
        %1273 = vperm.xlu0 %1272, %v1133
        %v1274 = vpop.permute.xlu0 %1273
        %v1276 = vadd.f32 %v1269, %v1274
        %v1277 = vadd.f32 %v1270, %v1274
        %v1278 = vmax.f32 %v1276, 0.0
        %v1279 = vmax.f32 %v1277, 0.0
        %v1280 = vadd.f32 %v1278, %v1279
        %1281 = vadd.xlane.f32.xlu0 %v1280
        %v1282 = vpop.xlane.xlu0 %1281
        %v1283 = vrcp.pop 256.0
        %v1284 = vmul.f32 %v1282, %v1283
        %v1285 = vld [vmem:[%s12] sm:$0x3]
        %v1286 = vld [vmem:[%s14] sm:$0xff]
        %v1287 = vld [vmem:[%s13] sm:$0x3]
        %v1288 = vlaneseq
        %v1289 = vshrl.u32 %v1288, 7
        %v1290 = vsub.s32 0, %v1289
        %v1291 = vrot.slane %v1284, %v1290
        %v1292 = vmul.f32 %v1285, %v1291
        %v1293 = vadd.f32 %v1287, %v1292
        %v1294 = vlaneseq
        %v1295 = vshrl.u32 %v1294, 7
        %v1296 = vsub.s32 1, %v1295
        %v1297 = vrot.slane %v1284, %v1296
        %v1298 = vmul.f32 %v1285, %v1297
        %1300 = vrot.lane.b32.xlu0 %v1298, 127
        %v1301 = vpop.permute.xlu0 %1300
        %v1303 = vadd.f32 %v1293, %v1301
        %v1304 = vlaneseq
        %v1305 = vshrl.u32 %v1304, 7
        %v1306 = vsub.s32 2, %v1305
        %v1307 = vrot.slane %v1284, %v1306
        %v1308 = vmul.f32 %v1285, %v1307
        %1310 = vrot.lane.b32.xlu0 %v1308, 126
        %v1311 = vpop.permute.xlu0 %1310
        %v1313 = vadd.f32 %v1303, %v1311
        %v1314 = vlaneseq
        %v1315 = vshrl.u32 %v1314, 7
        %v1316 = vsub.s32 3, %v1315
        %v1317 = vrot.slane %v1284, %v1316
        %v1318 = vmul.f32 %v1285, %v1317
        %1320 = vrot.lane.b32.xlu0 %v1318, 125
        %v1321 = vpop.permute.xlu0 %1320
        %v1323 = vadd.f32 %v1313, %v1321
        %v1324 = vlaneseq
        %v1325 = vshrl.u32 %v1324, 7
        %v1326 = vsub.s32 4, %v1325
        %v1327 = vrot.slane %v1284, %v1326
        %v1328 = vmul.f32 %v1285, %v1327
        %1330 = vrot.lane.b32.xlu0 %v1328, 124
        %v1331 = vpop.permute.xlu0 %1330
        %v1333 = vadd.f32 %v1323, %v1331
        %v1334 = vlaneseq
        %v1335 = vshrl.u32 %v1334, 7
        %v1336 = vsub.s32 5, %v1335
        %v1337 = vrot.slane %v1284, %v1336
        %v1338 = vmul.f32 %v1285, %v1337
        %1340 = vrot.lane.b32.xlu0 %v1338, 123
        %v1341 = vpop.permute.xlu0 %1340
        %v1343 = vadd.f32 %v1333, %v1341
        %v1344 = vlaneseq
        %v1345 = vshrl.u32 %v1344, 7
        %v1346 = vsub.s32 6, %v1345
        %v1347 = vrot.slane %v1284, %v1346
        %v1348 = vmul.f32 %v1285, %v1347
        %1350 = vrot.lane.b32.xlu0 %v1348, 122
        %v1351 = vpop.permute.xlu0 %1350
        %v1353 = vadd.f32 %v1343, %v1351
        %v1354 = vlaneseq
        %v1355 = vshrl.u32 %v1354, 7
        %v1356 = vsub.s32 7, %v1355
        %v1357 = vrot.slane %v1284, %v1356
        %v1358 = vmul.f32 %v1285, %v1357
        %1360 = vrot.lane.b32.xlu0 %v1358, 121
        %v1361 = vpop.permute.xlu0 %1360
        %v1363 = vadd.f32 %v1353, %v1361
        %v1364 = vmax.f32 %v1363, 0.0
        %v1365 = vld [vmem:[%s15] sm:$0xff]
        %v1366 = vlaneseq
        %v1367 = vshrl.u32 %v1366, 7
        %v1368 = vsub.s32 0, %v1367
        %v1369 = vrot.slane %v1364, %v1368
        %v1370 = vmul.f32 %v1286, %v1369
        %v1371 = vadd.f32 %v1365, %v1370
        %v1372 = vlaneseq
        %v1373 = vshrl.u32 %v1372, 7
        %v1374 = vsub.s32 1, %v1373
        %v1375 = vrot.slane %v1364, %v1374
        %1377 = vrot.lane.b32.xlu0 %v1375, 1
        %v1378 = vpop.permute.xlu0 %1377
        %v1380 = vmul.f32 %v1286, %v1378
        %1382 = vrot.lane.b32.xlu0 %v1380, 127
        %v1383 = vpop.permute.xlu0 %1382
        %v1385 = vadd.f32 %v1371, %v1383
        %v1386 = vxor.u32 %v1385, 2147483648
        %v1387 = vmul.f32 %v1386, 1.442695
        %v1388 = vpow.pop %v1387
        %v1389 = vadd.f32 %v1388, 1.0
        %v1390 = vrcp.pop %v1389
        %v1391 = vmul.f32 1.0, %v1390
        %1393 = vset.pattern.permute.xlu0 0
        %1394 = vperm.xlu0 %1393, %v1391
        %v1395 = vpop.permute.xlu0 %1394
        %v1397 = vmul.f32 %v1278, %v1395
        %v1398 = vmul.f32 %v1279, %v1395
        %v1399 = vld [vmem:[%s16] sm:$0xff]
        %v1400 = vld [vmem:[%s17] sm:$0xff]
        %1402 = vset.pattern.permute.xlu0 0
        %1403 = vperm.xlu0 %1402, %v1399
        %v1404 = vpop.permute.xlu0 %1403
        %v1406 = vlaneseq
        %v1407 = vshrl.u32 %v1406, 7
        %v1408 = vsub.s32 0, %v1407
        %v1409 = vrot.slane %v1397, %v1408
        %v1410 = vlaneseq
        %v1411 = vshrl.u32 %v1410, 7
        %v1412 = vsub.s32 0, %v1411
        %v1413 = vrot.slane %v1398, %v1412
        %v1414 = vmul.f32 %v1404, %v1409
        %v1415 = vmul.f32 %v1404, %v1413
        %v1416 = vadd.f32 %v1414, 0.0
        %v1417 = vadd.f32 %v1415, 0.0
        %1418 = vset.pattern.permute.xlu0 1
        %1419 = vperm.xlu0 %1418, %v1399
        %v1420 = vpop.permute.xlu0 %1419
        %v1422 = vlaneseq
        %v1423 = vshrl.u32 %v1422, 7
        %v1424 = vsub.s32 1, %v1423
        %v1425 = vrot.slane %v1397, %v1424
        %v1426 = vlaneseq
        %v1427 = vshrl.u32 %v1426, 7
        %v1428 = vsub.s32 1, %v1427
        %v1429 = vrot.slane %v1398, %v1428
        %v1430 = vmul.f32 %v1420, %v1425
        %v1431 = vmul.f32 %v1420, %v1429
        %v1432 = vadd.f32 %v1416, %v1430
        %v1433 = vadd.f32 %v1417, %v1431
        %1434 = vset.pattern.permute.xlu0 2
        %1435 = vperm.xlu0 %1434, %v1399
        %v1436 = vpop.permute.xlu0 %1435
        %v1438 = vlaneseq
        %v1439 = vshrl.u32 %v1438, 7
        %v1440 = vsub.s32 2, %v1439
        %v1441 = vrot.slane %v1397, %v1440
        %v1442 = vlaneseq
        %v1443 = vshrl.u32 %v1442, 7
        %v1444 = vsub.s32 2, %v1443
        %v1445 = vrot.slane %v1398, %v1444
        %v1446 = vmul.f32 %v1436, %v1441
        %v1447 = vmul.f32 %v1436, %v1445
        %v1448 = vadd.f32 %v1432, %v1446
        %v1449 = vadd.f32 %v1433, %v1447
        %1450 = vset.pattern.permute.xlu0 3
        %1451 = vperm.xlu0 %1450, %v1399
        %v1452 = vpop.permute.xlu0 %1451
        %v1454 = vlaneseq
        %v1455 = vshrl.u32 %v1454, 7
        %v1456 = vsub.s32 3, %v1455
        %v1457 = vrot.slane %v1397, %v1456
        %v1458 = vlaneseq
        %v1459 = vshrl.u32 %v1458, 7
        %v1460 = vsub.s32 3, %v1459
        %v1461 = vrot.slane %v1398, %v1460
        %v1462 = vmul.f32 %v1452, %v1457
        %v1463 = vmul.f32 %v1452, %v1461
        %v1464 = vadd.f32 %v1448, %v1462
        %v1465 = vadd.f32 %v1449, %v1463
        %1466 = vset.pattern.permute.xlu0 4
        %1467 = vperm.xlu0 %1466, %v1399
        %v1468 = vpop.permute.xlu0 %1467
        %v1470 = vlaneseq
        %v1471 = vshrl.u32 %v1470, 7
        %v1472 = vsub.s32 4, %v1471
        %v1473 = vrot.slane %v1397, %v1472
        %v1474 = vlaneseq
        %v1475 = vshrl.u32 %v1474, 7
        %v1476 = vsub.s32 4, %v1475
        %v1477 = vrot.slane %v1398, %v1476
        %v1478 = vmul.f32 %v1468, %v1473
        %v1479 = vmul.f32 %v1468, %v1477
        %v1480 = vadd.f32 %v1464, %v1478
        %v1481 = vadd.f32 %v1465, %v1479
        %1482 = vset.pattern.permute.xlu0 5
        %1483 = vperm.xlu0 %1482, %v1399
        %v1484 = vpop.permute.xlu0 %1483
        %v1486 = vlaneseq
        %v1487 = vshrl.u32 %v1486, 7
        %v1488 = vsub.s32 5, %v1487
        %v1489 = vrot.slane %v1397, %v1488
        %v1490 = vlaneseq
        %v1491 = vshrl.u32 %v1490, 7
        %v1492 = vsub.s32 5, %v1491
        %v1493 = vrot.slane %v1398, %v1492
        %v1494 = vmul.f32 %v1484, %v1489
        %v1495 = vmul.f32 %v1484, %v1493
        %v1496 = vadd.f32 %v1480, %v1494
        %v1497 = vadd.f32 %v1481, %v1495
        %1498 = vset.pattern.permute.xlu0 6
        %1499 = vperm.xlu0 %1498, %v1399
        %v1500 = vpop.permute.xlu0 %1499
        %v1502 = vlaneseq
        %v1503 = vshrl.u32 %v1502, 7
        %v1504 = vsub.s32 6, %v1503
        %v1505 = vrot.slane %v1397, %v1504
        %v1506 = vlaneseq
        %v1507 = vshrl.u32 %v1506, 7
        %v1508 = vsub.s32 6, %v1507
        %v1509 = vrot.slane %v1398, %v1508
        %v1510 = vmul.f32 %v1500, %v1505
        %v1511 = vmul.f32 %v1500, %v1509
        %v1512 = vadd.f32 %v1496, %v1510
        %v1513 = vadd.f32 %v1497, %v1511
        %1514 = vset.pattern.permute.xlu0 7
        %1515 = vperm.xlu0 %1514, %v1399
        %v1516 = vpop.permute.xlu0 %1515
        %v1518 = vlaneseq
        %v1519 = vshrl.u32 %v1518, 7
        %v1520 = vsub.s32 7, %v1519
        %v1521 = vrot.slane %v1397, %v1520
        %v1522 = vlaneseq
        %v1523 = vshrl.u32 %v1522, 7
        %v1524 = vsub.s32 7, %v1523
        %v1525 = vrot.slane %v1398, %v1524
        %v1526 = vmul.f32 %v1516, %v1521
        %v1527 = vmul.f32 %v1516, %v1525
        %v1528 = vadd.f32 %v1512, %v1526
        %v1529 = vadd.f32 %v1513, %v1527
        %1531 = vset.pattern.permute.xlu0 0
        %1532 = vperm.xlu0 %1531, %v1400
        %v1533 = vpop.permute.xlu0 %1532
        %v1535 = vadd.f32 %v1528, %v1533
        %v1536 = vadd.f32 %v1529, %v1533
        %v1537 = vadd.f32 %v1535, %v990
        %v1538 = vadd.f32 %v1536, %v991
        %1539 = vst [vmem:[%s568] sm:$0xff] %v1537
        %1540 = vst [vmem:[%s568 + $0x8] sm:$0xff] %v1538
        %s1541 = sand.u32 %s423, 1
        %s1542 = scalar_lea.sflag [#allocation3], %s1541
        %s1543 = sand.u32 %s423, 1
        %s1544 = smul.addr %s1543, 16
        %s1545 = scalar_lea.vmem [#allocation2], %s1544
        // Predicated region
        $region93: #{tpu_custom_call.1} parent=91 // pred_check
          %p1546 = pneg %p433
        $region94: #{tpu_custom_call.1} parent=91 // pred_check_branch
          %1548 = sbr.rel (%p1546) target = $region96
        $region95: #{tpu_custom_call.1} parent=91 // pred_region
          %s1550 = ssub.s32 256, 256
          %1551 = vsyncadd %s1542, %s1550
          %s1552 = smul.addr %s32, 2
          %s1553 = smul.addr %s1552, 128
          %s1554 = scalar_lea.hbm %s18, %s1553
          %s1556 = sshll.u32 %s1545, 4
          %s1557 = int_to_ptr.vmem [resolvable:$true] %s1556
          %1559 = dma.vmem_to_hbm [thread:$0]  %s1557, 256, %s1554, %s1542
        $region96: #{tpu_custom_call.1} parent=91 // pred_fallthru
          _
      $region92: #{tpu_custom_call.1} parent=5 // pred_fallthru
        _
      %p1560 = scmp.le.s32.totalorder 2, %s27
      // Predicated region
      $region97: #{tpu_custom_call.1} parent=5 // pred_check
        %p1561 = pneg %p1560
      $region98: #{tpu_custom_call.1} parent=5 // pred_check_branch
        %1563 = sbr.rel (%p1561) target = $region100
      $region99: #{tpu_custom_call.1} parent=5 // pred_region
        %s1564 = ssub.s32 %s27, 2
        // Predicated region
        $region101: #{tpu_custom_call.1} parent=99 // pred_check
          %p1565 = pneg %p439
        $region102: #{tpu_custom_call.1} parent=99 // pred_check_branch
          %1567 = sbr.rel (%p1565) target = $region104
        $region103: #{tpu_custom_call.1} parent=99 // pred_region
          %s1568 = sand.u32 %s424, 1
          %s1569 = scalar_lea.sflag [#allocation3], %s1568
          %s1570 = sand.u32 %s424, 1
          %s1571 = smul.addr %s1570, 16
          %s1572 = scalar_lea.vmem [#allocation2], %s1571
          %1573 = dma.done %s1569, 256
        $region104: #{tpu_custom_call.1} parent=99 // pred_fallthru
          _
      $region100: #{tpu_custom_call.1} parent=5 // pred_fallthru
        _
    $region6: #{tpu_custom_call.1} parent=1 // loop_footer
      %s31 = sadd.s32 1, %s27
    $region7: #{tpu_custom_call.1} parent=1 // loop_footer_branch
      %26 = sbr.rel target = $region3
    $region8: #{tpu_custom_call.1} parent=1 // loop_exit
      _
    %1574 = vsyncpa [#allocation3], 1
    %s1575 = scalar_lea.sflag [#allocation3], 1
    %1576 = vsyncpa %s1575, 1

</llo_original>
